<compile_context>
chip_gen: v5e
topology: v5e:2x2
jax: 0.10.0
libtpu: 0.0.40
codegen_flags: <defaults>
</compile_context>

<pallas_src>
import math

import jax
import jax.numpy as jnp
from jax.experimental import pallas as pl
from jax.experimental.pallas import tpu as pltpu


# ---------------------------------------------------------------------------
# Pallas kernel: whole forward pass for one (TB, in_dim) batch tile.
# All activations live with batch on the LANE axis: (features, TB).
# ---------------------------------------------------------------------------
def _regressor_kernel(x_ref, w1_ref, b1_ref,
                      wa_ref, ba_ref, wb_ref, bb_ref,
                      wo1_ref, bo1_ref, wo2_ref, bo2_ref,
                      y_ref):
    mm = w1_ref.dtype                               # bf16 matmul operand dtype
    # (TB, in_dim) f32 tile -> bf16 in-kernel (no wrapper-side HBM pass).
    x_bf = x_ref[...].astype(mm)

    # input_proj: Linear(+folded BN) -> ReLU.  Contract on in_dim of both
    # operands (trans-B orientation) so the result is batch-on-lanes (H, TB).
    h = jax.lax.dot_general(w1_ref[...], x_bf,
                            dimension_numbers=(((1,), (1,)), ((), ())),
                            preferred_element_type=jnp.float32)
    h = jnp.maximum(h + b1_ref[...], 0.0).astype(mm)           # (H, TB) bf16

    # residual blocks (weights stacked along leading axis; static unroll)
    for i in range(wa_ref.shape[0]):
        t = jnp.dot(wa_ref[i], h, preferred_element_type=jnp.float32) + ba_ref[i]
        t = jnp.maximum(t, 0.0).astype(mm)                      # ReLU, bf16
        t = jnp.dot(wb_ref[i], t, preferred_element_type=jnp.float32) + bb_ref[i]
        # residual add + ReLU in f32 on the fresh accumulator, carry bf16
        h = jnp.maximum(t + h.astype(jnp.float32), 0.0).astype(mm)

    # output head: Linear(H, 64) -> ReLU -> Linear(64, 1) -> Sigmoid
    o = jnp.dot(wo1_ref[...], h, preferred_element_type=jnp.float32) + bo1_ref[...]
    o = jnp.maximum(o, 0.0)                                     # (64, TB) f32
    # Final 64->1 projection: VPU multiply + cross-sublane (XLU) reduction
    # instead of a 1-wide MXU matmul.
    z = jnp.sum(o * wo2_ref[...], axis=0, keepdims=True) + bo2_ref[...]
    y_ref[...] = jax.nn.sigmoid(z)                              # (1, TB) f32


# ---------------------------------------------------------------------------
# Wrapper: batch grid, tile/VMEM sizing, BlockSpecs.  No relayout of x.
# ---------------------------------------------------------------------------
def deep_residual_regressor(x, params, *, tile_batch=8192):
    """Fused forward pass. x: (B, input_dim) float32 -> (B, 1) float32."""
    (w1t, b1, wat, ba, wbt, bb, wo1t, bo1, wo2, bo2) = params
    B, in_dim = x.shape
    H = w1t.shape[0]
    nb = wat.shape[0]

    # Batch tile: multiple of 128 lanes.
    tile_batch = max(128, (int(tile_batch) // 128) * 128)
    b_round = pl.cdiv(B, 128) * 128
    TB = min(tile_batch, b_round)
    if TB >= b_round:
        # Batch would fit in a single tile: split into (at least) two grid
        # steps so v7x's two TensorCores both get work and the x DMA still
        # pipelines; no effect on single-TC v5e/v6e beyond an extra tiny step.
        TB = max(128, pl.cdiv(b_round, 2 * 128) * 128)
    grid_b = pl.cdiv(b_round, TB)
    Bp = grid_b * TB

    # Scoped-VMEM limit from the working set (bf16 h + f32 accumulator + f32
    # head + double-buffered x tile + output), with headroom for Mosaic
    # temporaries.  Floor 32 MiB (covers v5e's 16 MiB default), cap 64 MiB.
    w_bytes = sum(int(p.size) * p.dtype.itemsize for p in params)
    act_bytes = TB * (2 * H + 4 * H + 4 * 64 + 2 * 4 * in_dim + 2 * 4)
    vmem_limit = int(min(64 << 20, max(32 << 20, 2 * act_bytes + w_bytes + (4 << 20))))

    flops = 2 * Bp * (in_dim * H + 2 * nb * H * H + H * 64 + 64)
    bytes_accessed = B * in_dim * 4 + Bp * 4 + w_bytes

    in_specs = [
        pl.BlockSpec((TB, in_dim), lambda i: (i, 0)),   # x tile, auto-pipelined
        pl.BlockSpec(w1t.shape,  lambda i: (0, 0)),     # weights: VMEM-resident
        pl.BlockSpec(b1.shape,   lambda i: (0, 0)),
        pl.BlockSpec(wat.shape,  lambda i: (0, 0, 0)),
        pl.BlockSpec(ba.shape,   lambda i: (0, 0, 0)),
        pl.BlockSpec(wbt.shape,  lambda i: (0, 0, 0)),
        pl.BlockSpec(bb.shape,   lambda i: (0, 0, 0)),
        pl.BlockSpec(wo1t.shape, lambda i: (0, 0)),
        pl.BlockSpec(bo1.shape,  lambda i: (0, 0)),
        pl.BlockSpec(wo2.shape,  lambda i: (0, 0)),
        pl.BlockSpec(bo2.shape,  lambda i: (0, 0)),
    ]

    yT = pl.pallas_call(
        _regressor_kernel,
        out_shape=jax.ShapeDtypeStruct((1, Bp), jnp.float32),
        grid=(grid_b,),
        in_specs=in_specs,
        out_specs=pl.BlockSpec((1, TB), lambda i: (0, i)),      # lane-dense out
        compiler_params=pltpu.CompilerParams(
            dimension_semantics=("parallel",),                  # dual-TC on v7x
            vmem_limit_bytes=vmem_limit),
        cost_estimate=pl.CostEstimate(
            flops=int(flops), transcendentals=int(Bp),
            bytes_accessed=int(bytes_accessed)),
    )(x, w1t, b1, wat, ba, wbt, bb, wo1t, bo1, wo2, bo2)

    return yT[0, :B].reshape(B, 1)


# ---------------------------------------------------------------------------
# Deterministic parameter construction (glue, plain JAX).
# Returns BN-folded, transposed, kernel-ready params:
#   w1t (H,in) bf16, b1 (H,1) f32,
#   wat/wbt (nb,H,H) bf16, ba/bb (nb,H,1) f32,
#   wo1t (64,H) bf16, bo1 (64,1) f32, wo2 (64,1) f32, bo2 (1,1) f32
# ---------------------------------------------------------------------------
def init_params(key, input_dim, hidden_dim=32, num_blocks=3,
                matmul_dtype=jnp.bfloat16):
    eps = 1e-5

    def linear(k, fan_in, fan_out):
        bound = 1.0 / math.sqrt(fan_in)
        kw, kb = jax.random.split(k)
        w = jax.random.uniform(kw, (fan_in, fan_out), jnp.float32, -bound, bound)
        b = jax.random.uniform(kb, (fan_out,), jnp.float32, -bound, bound)
        return w, b

    def bn_affine(k, dim):
        # eval-mode BatchNorm1d: y = gamma * (x - rm) / sqrt(rv + eps) + beta
        kg, kb, km, kv = jax.random.split(k, 4)
        gamma = 1.0 + 0.1 * jax.random.normal(kg, (dim,), jnp.float32)
        beta = 0.1 * jax.random.normal(kb, (dim,), jnp.float32)
        rm = 0.1 * jax.random.normal(km, (dim,), jnp.float32)
        rv = 1.0 + 0.1 * jax.random.uniform(kv, (dim,), jnp.float32)
        scale = gamma / jnp.sqrt(rv + eps)
        shift = beta - rm * scale
        return scale, shift

    def fold(w, b, scale, shift):
        # BN(x @ W + b) == x @ (W * scale) + (b * scale + shift)
        return w * scale[None, :], b * scale + shift

    keys = jax.random.split(key, 4 + 4 * num_blocks)
    ki = iter(range(len(keys)))

    # input_proj: Linear + BN (folded), then transpose for the (W @ x) layout.
    w1, b1 = linear(keys[next(ki)], input_dim, hidden_dim)
    s1, sh1 = bn_affine(keys[next(ki)], hidden_dim)
    w1, b1 = fold(w1, b1, s1, sh1)
    w1t = w1.T.astype(matmul_dtype)                 # (H, in)
    b1c = b1[:, None]                               # (H, 1) f32

    wa_l, ba_l, wb_l, bb_l = [], [], [], []
    for _ in range(num_blocks):
        wa, ba_ = linear(keys[next(ki)], hidden_dim, hidden_dim)
        sa, sha = bn_affine(keys[next(ki)], hidden_dim)
        wa, ba_ = fold(wa, ba_, sa, sha)
        wb, bb_ = linear(keys[next(ki)], hidden_dim, hidden_dim)
        sb, shb = bn_affine(keys[next(ki)], hidden_dim)
        wb, bb_ = fold(wb, bb_, sb, shb)
        wa_l.append(wa.T.astype(matmul_dtype)); ba_l.append(ba_[:, None])
        wb_l.append(wb.T.astype(matmul_dtype)); bb_l.append(bb_[:, None])

    wat = jnp.stack(wa_l)                           # (nb, H, H) bf16
    ba = jnp.stack(ba_l)                            # (nb, H, 1) f32
    wbt = jnp.stack(wb_l)                           # (nb, H, H) bf16
    bb = jnp.stack(bb_l)                            # (nb, H, 1) f32

    # output head
    wo1, bo1 = linear(keys[next(ki)], hidden_dim, 64)
    wo2, bo2 = linear(keys[next(ki)], 64, 1)
    wo1t = wo1.T.astype(matmul_dtype)               # (64, H) bf16
    bo1c = bo1[:, None]                             # (64, 1) f32
    wo2c = wo2                                      # (64, 1) f32 (VPU reduce)
    bo2c = bo2[:, None]                             # (1, 1)  f32

    return [w1t, b1c, wat, ba, wbt, bb, wo1t, bo1c, wo2c, bo2c]


# ---------------------------------------------------------------------------
# Pure-JAX reference mirroring the kernel numerics: bf16 matmul operands,
# f32 MXU accumulation, bf16 loop-carried activations, f32 residual add.
# ---------------------------------------------------------------------------
def reference_forward(x, params):
    (w1t, b1, wat, ba, wbt, bb, wo1t, bo1, wo2, bo2) = params
    mm = w1t.dtype
    h = jnp.dot(x.astype(mm), w1t.T, preferred_element_type=jnp.float32)
    h = jnp.maximum(h + b1[:, 0], 0.0).astype(mm)
    for i in range(wat.shape[0]):
        t = jnp.dot(h, wat[i].T, preferred_element_type=jnp.float32) + ba[i, :, 0]
        t = jnp.maximum(t, 0.0).astype(mm)
        t = jnp.dot(t, wbt[i].T, preferred_element_type=jnp.float32) + bb[i, :, 0]
        h = jnp.maximum(t + h.astype(jnp.float32), 0.0).astype(mm)
    o = jnp.dot(h, wo1t.T, preferred_element_type=jnp.float32) + bo1[:, 0]
    o = jnp.maximum(o, 0.0)
    z = jnp.dot(o, wo2) + bo2[0]
    return jax.nn.sigmoid(z)


if __name__ == "__main__":
    key = jax.random.PRNGKey(0)
    kx, kp = jax.random.split(key)

    batch = 300           # not a multiple of 128 -> exercises the edge-tile path
    input_dim = 16
    hidden_dim = 32
    num_blocks = 3

    x = jax.random.normal(kx, (batch, input_dim), jnp.float32)
    params = init_params(kp, input_dim, hidden_dim, num_blocks)

    # Default tile_batch=8192; with batch=300 the wrapper picks TB=256 ->
    # 2 grid steps (dual-TC split on v7x; plain 2-step pipeline on v5e/v6e).
    y = deep_residual_regressor(x, params)
    y = jax.block_until_ready(y)

    y_ref = reference_forward(x, params)
    assert y.shape == (batch, 1)
    # Accuracy contract is against the bf16-operand reference (per perf-review
    # correctness note); tolerance covers MXU-vs-XLA accumulation-order and
    # EUP-vs-XLA exp differences plus rare 1-ulp bf16 rounding flips.
    assert jnp.allclose(y, y_ref, atol=5e-3, rtol=5e-3), "mismatch vs JAX reference"

    print("KERNEL_OK")
</pallas_src>

<mosaic_0001>
module attributes {stable_mosaic.version = 11 : i64} {
  func.func @_regressor_kernel(%arg0: i32, %arg1: memref<256x16xf32, #tpu.memory_space<vmem>>, %arg2: memref<32x16xbf16, #tpu.memory_space<vmem>>, %arg3: memref<32x1xf32, #tpu.memory_space<vmem>>, %arg4: memref<3x32x32xbf16, #tpu.memory_space<vmem>>, %arg5: memref<3x32x1xf32, #tpu.memory_space<vmem>>, %arg6: memref<3x32x32xbf16, #tpu.memory_space<vmem>>, %arg7: memref<3x32x1xf32, #tpu.memory_space<vmem>>, %arg8: memref<64x32xbf16, #tpu.memory_space<vmem>>, %arg9: memref<64x1xf32, #tpu.memory_space<vmem>>, %arg10: memref<64x1xf32, #tpu.memory_space<vmem>>, %arg11: memref<1x1xf32, #tpu.memory_space<vmem>>, %arg12: memref<1x256xf32, #tpu.memory_space<vmem>>) attributes {dimension_semantics = [#tpu.dimension_semantics<parallel>], iteration_bounds = array<i64: 2>, scalar_prefetch = 0 : i64, scratch_operands = 0 : i64, tpu.core_type = #tpu.core_type<tc>, window_params = [{transform_indices = @transform_0, window_bounds = array<i64: 256, 16>}, {pipeline_mode = #tpu.pipeline_mode<synchronous>, transform_indices = @transform_1, window_bounds = array<i64: 32, 16>}, {pipeline_mode = #tpu.pipeline_mode<synchronous>, transform_indices = @transform_2, window_bounds = array<i64: 32, 1>}, {pipeline_mode = #tpu.pipeline_mode<synchronous>, transform_indices = @transform_3, window_bounds = array<i64: 3, 32, 32>}, {pipeline_mode = #tpu.pipeline_mode<synchronous>, transform_indices = @transform_4, window_bounds = array<i64: 3, 32, 1>}, {pipeline_mode = #tpu.pipeline_mode<synchronous>, transform_indices = @transform_5, window_bounds = array<i64: 3, 32, 32>}, {pipeline_mode = #tpu.pipeline_mode<synchronous>, transform_indices = @transform_6, window_bounds = array<i64: 3, 32, 1>}, {pipeline_mode = #tpu.pipeline_mode<synchronous>, transform_indices = @transform_7, window_bounds = array<i64: 64, 32>}, {pipeline_mode = #tpu.pipeline_mode<synchronous>, transform_indices = @transform_8, window_bounds = array<i64: 64, 1>}, {pipeline_mode = #tpu.pipeline_mode<synchronous>, transform_indices = @transform_9, window_bounds = array<i64: 64, 1>}, {pipeline_mode = #tpu.pipeline_mode<synchronous>, transform_indices = @transform_10, window_bounds = array<i64: 1, 1>}, {transform_indices = @transform_11, window_bounds = array<i64: 1, 256>}]} {
    %c0 = arith.constant 0 : index
    %c0_0 = arith.constant 0 : index
    %0 = vector.load %arg1[%c0, %c0_0] : memref<256x16xf32, #tpu.memory_space<vmem>>, vector<256x16xf32>
    %1 = arith.truncf %0 : vector<256x16xf32> to vector<256x16xbf16>
    %c0_1 = arith.constant 0 : index
    %c0_2 = arith.constant 0 : index
    %2 = vector.load %arg2[%c0_1, %c0_2] : memref<32x16xbf16, #tpu.memory_space<vmem>>, vector<32x16xbf16>
    %cst = arith.constant dense<0.000000e+00> : vector<32x256xf32>
    %3 = tpu.matmul %2, %1, %cst {dimension_numbers = #tpu.dot_dimension_numbers<[1], [1], [0], [0], [0, 0, 1, 0], [], []>} : vector<32x16xbf16>, vector<256x16xbf16>, vector<32x256xf32> -> vector<32x256xf32>
    %c0_3 = arith.constant 0 : index
    %c0_4 = arith.constant 0 : index
    %4 = vector.load %arg3[%c0_3, %c0_4] : memref<32x1xf32, #tpu.memory_space<vmem>>, vector<32x1xf32>
    %5 = vector.broadcast %4 : vector<32x1xf32> to vector<32x256xf32>
    %6 = arith.addf %3, %5 : vector<32x256xf32>
    %cst_5 = arith.constant 0.000000e+00 : f32
    %7 = vector.broadcast %cst_5 : f32 to vector<32x256xf32>
    %8 = arith.maximumf %6, %7 : vector<32x256xf32>
    %9 = arith.truncf %8 : vector<32x256xf32> to vector<32x256xbf16>
    %c0_6 = arith.constant 0 : index
    %c0_7 = arith.constant 0 : index
    %c0_8 = arith.constant 0 : index
    %10 = vector.load %arg4[%c0_6, %c0_7, %c0_8] : memref<3x32x32xbf16, #tpu.memory_space<vmem>>, vector<1x32x32xbf16>
    %11 = vector.shape_cast %10 : vector<1x32x32xbf16> to vector<32x32xbf16>
    %cst_9 = arith.constant dense<0.000000e+00> : vector<32x256xf32>
    %12 = tpu.matmul %11, %9, %cst_9 {dimension_numbers = #tpu.dot_dimension_numbers<[1], [0], [0], [1], [0, 0, 1, 1], [], []>} : vector<32x32xbf16>, vector<32x256xbf16>, vector<32x256xf32> -> vector<32x256xf32>
    %c0_10 = arith.constant 0 : index
    %c0_11 = arith.constant 0 : index
    %c0_12 = arith.constant 0 : index
    %13 = vector.load %arg5[%c0_10, %c0_11, %c0_12] : memref<3x32x1xf32, #tpu.memory_space<vmem>>, vector<1x32x1xf32>
    %14 = vector.shape_cast %13 : vector<1x32x1xf32> to vector<32x1xf32>
    %15 = vector.broadcast %14 : vector<32x1xf32> to vector<32x256xf32>
    %16 = arith.addf %12, %15 : vector<32x256xf32>
    %cst_13 = arith.constant 0.000000e+00 : f32
    %17 = vector.broadcast %cst_13 : f32 to vector<32x256xf32>
    %18 = arith.maximumf %16, %17 : vector<32x256xf32>
    %19 = arith.truncf %18 : vector<32x256xf32> to vector<32x256xbf16>
    %c0_14 = arith.constant 0 : index
    %c0_15 = arith.constant 0 : index
    %c0_16 = arith.constant 0 : index
    %20 = vector.load %arg6[%c0_14, %c0_15, %c0_16] : memref<3x32x32xbf16, #tpu.memory_space<vmem>>, vector<1x32x32xbf16>
    %21 = vector.shape_cast %20 : vector<1x32x32xbf16> to vector<32x32xbf16>
    %cst_17 = arith.constant dense<0.000000e+00> : vector<32x256xf32>
    %22 = tpu.matmul %21, %19, %cst_17 {dimension_numbers = #tpu.dot_dimension_numbers<[1], [0], [0], [1], [0, 0, 1, 1], [], []>} : vector<32x32xbf16>, vector<32x256xbf16>, vector<32x256xf32> -> vector<32x256xf32>
    %c0_18 = arith.constant 0 : index
    %c0_19 = arith.constant 0 : index
    %c0_20 = arith.constant 0 : index
    %23 = vector.load %arg7[%c0_18, %c0_19, %c0_20] : memref<3x32x1xf32, #tpu.memory_space<vmem>>, vector<1x32x1xf32>
    %24 = vector.shape_cast %23 : vector<1x32x1xf32> to vector<32x1xf32>
    %25 = vector.broadcast %24 : vector<32x1xf32> to vector<32x256xf32>
    %26 = arith.addf %22, %25 : vector<32x256xf32>
    %27 = arith.extf %9 : vector<32x256xbf16> to vector<32x256xf32>
    %28 = arith.addf %26, %27 : vector<32x256xf32>
    %cst_21 = arith.constant 0.000000e+00 : f32
    %29 = vector.broadcast %cst_21 : f32 to vector<32x256xf32>
    %30 = arith.maximumf %28, %29 : vector<32x256xf32>
    %31 = arith.truncf %30 : vector<32x256xf32> to vector<32x256xbf16>
    %c1 = arith.constant 1 : index
    %c0_22 = arith.constant 0 : index
    %c0_23 = arith.constant 0 : index
    %32 = vector.load %arg4[%c1, %c0_22, %c0_23] : memref<3x32x32xbf16, #tpu.memory_space<vmem>>, vector<1x32x32xbf16>
    %33 = vector.shape_cast %32 : vector<1x32x32xbf16> to vector<32x32xbf16>
    %cst_24 = arith.constant dense<0.000000e+00> : vector<32x256xf32>
    %34 = tpu.matmul %33, %31, %cst_24 {dimension_numbers = #tpu.dot_dimension_numbers<[1], [0], [0], [1], [0, 0, 1, 1], [], []>} : vector<32x32xbf16>, vector<32x256xbf16>, vector<32x256xf32> -> vector<32x256xf32>
    %c1_25 = arith.constant 1 : index
    %c0_26 = arith.constant 0 : index
    %c0_27 = arith.constant 0 : index
    %35 = vector.load %arg5[%c1_25, %c0_26, %c0_27] : memref<3x32x1xf32, #tpu.memory_space<vmem>>, vector<1x32x1xf32>
    %36 = vector.shape_cast %35 : vector<1x32x1xf32> to vector<32x1xf32>
    %37 = vector.broadcast %36 : vector<32x1xf32> to vector<32x256xf32>
    %38 = arith.addf %34, %37 : vector<32x256xf32>
    %cst_28 = arith.constant 0.000000e+00 : f32
    %39 = vector.broadcast %cst_28 : f32 to vector<32x256xf32>
    %40 = arith.maximumf %38, %39 : vector<32x256xf32>
    %41 = arith.truncf %40 : vector<32x256xf32> to vector<32x256xbf16>
    %c1_29 = arith.constant 1 : index
    %c0_30 = arith.constant 0 : index
    %c0_31 = arith.constant 0 : index
    %42 = vector.load %arg6[%c1_29, %c0_30, %c0_31] : memref<3x32x32xbf16, #tpu.memory_space<vmem>>, vector<1x32x32xbf16>
    %43 = vector.shape_cast %42 : vector<1x32x32xbf16> to vector<32x32xbf16>
    %cst_32 = arith.constant dense<0.000000e+00> : vector<32x256xf32>
    %44 = tpu.matmul %43, %41, %cst_32 {dimension_numbers = #tpu.dot_dimension_numbers<[1], [0], [0], [1], [0, 0, 1, 1], [], []>} : vector<32x32xbf16>, vector<32x256xbf16>, vector<32x256xf32> -> vector<32x256xf32>
    %c1_33 = arith.constant 1 : index
    %c0_34 = arith.constant 0 : index
    %c0_35 = arith.constant 0 : index
    %45 = vector.load %arg7[%c1_33, %c0_34, %c0_35] : memref<3x32x1xf32, #tpu.memory_space<vmem>>, vector<1x32x1xf32>
    %46 = vector.shape_cast %45 : vector<1x32x1xf32> to vector<32x1xf32>
    %47 = vector.broadcast %46 : vector<32x1xf32> to vector<32x256xf32>
    %48 = arith.addf %44, %47 : vector<32x256xf32>
    %49 = arith.extf %31 : vector<32x256xbf16> to vector<32x256xf32>
    %50 = arith.addf %48, %49 : vector<32x256xf32>
    %cst_36 = arith.constant 0.000000e+00 : f32
    %51 = vector.broadcast %cst_36 : f32 to vector<32x256xf32>
    %52 = arith.maximumf %50, %51 : vector<32x256xf32>
    %53 = arith.truncf %52 : vector<32x256xf32> to vector<32x256xbf16>
    %c2 = arith.constant 2 : index
    %c0_37 = arith.constant 0 : index
    %c0_38 = arith.constant 0 : index
    %54 = vector.load %arg4[%c2, %c0_37, %c0_38] : memref<3x32x32xbf16, #tpu.memory_space<vmem>>, vector<1x32x32xbf16>
    %55 = vector.shape_cast %54 : vector<1x32x32xbf16> to vector<32x32xbf16>
    %cst_39 = arith.constant dense<0.000000e+00> : vector<32x256xf32>
    %56 = tpu.matmul %55, %53, %cst_39 {dimension_numbers = #tpu.dot_dimension_numbers<[1], [0], [0], [1], [0, 0, 1, 1], [], []>} : vector<32x32xbf16>, vector<32x256xbf16>, vector<32x256xf32> -> vector<32x256xf32>
    %c2_40 = arith.constant 2 : index
    %c0_41 = arith.constant 0 : index
    %c0_42 = arith.constant 0 : index
    %57 = vector.load %arg5[%c2_40, %c0_41, %c0_42] : memref<3x32x1xf32, #tpu.memory_space<vmem>>, vector<1x32x1xf32>
    %58 = vector.shape_cast %57 : vector<1x32x1xf32> to vector<32x1xf32>
    %59 = vector.broadcast %58 : vector<32x1xf32> to vector<32x256xf32>
    %60 = arith.addf %56, %59 : vector<32x256xf32>
    %cst_43 = arith.constant 0.000000e+00 : f32
    %61 = vector.broadcast %cst_43 : f32 to vector<32x256xf32>
    %62 = arith.maximumf %60, %61 : vector<32x256xf32>
    %63 = arith.truncf %62 : vector<32x256xf32> to vector<32x256xbf16>
    %c2_44 = arith.constant 2 : index
    %c0_45 = arith.constant 0 : index
    %c0_46 = arith.constant 0 : index
    %64 = vector.load %arg6[%c2_44, %c0_45, %c0_46] : memref<3x32x32xbf16, #tpu.memory_space<vmem>>, vector<1x32x32xbf16>
    %65 = vector.shape_cast %64 : vector<1x32x32xbf16> to vector<32x32xbf16>
    %cst_47 = arith.constant dense<0.000000e+00> : vector<32x256xf32>
    %66 = tpu.matmul %65, %63, %cst_47 {dimension_numbers = #tpu.dot_dimension_numbers<[1], [0], [0], [1], [0, 0, 1, 1], [], []>} : vector<32x32xbf16>, vector<32x256xbf16>, vector<32x256xf32> -> vector<32x256xf32>
    %c2_48 = arith.constant 2 : index
    %c0_49 = arith.constant 0 : index
    %c0_50 = arith.constant 0 : index
    %67 = vector.load %arg7[%c2_48, %c0_49, %c0_50] : memref<3x32x1xf32, #tpu.memory_space<vmem>>, vector<1x32x1xf32>
    %68 = vector.shape_cast %67 : vector<1x32x1xf32> to vector<32x1xf32>
    %69 = vector.broadcast %68 : vector<32x1xf32> to vector<32x256xf32>
    %70 = arith.addf %66, %69 : vector<32x256xf32>
    %71 = arith.extf %53 : vector<32x256xbf16> to vector<32x256xf32>
    %72 = arith.addf %70, %71 : vector<32x256xf32>
    %cst_51 = arith.constant 0.000000e+00 : f32
    %73 = vector.broadcast %cst_51 : f32 to vector<32x256xf32>
    %74 = arith.maximumf %72, %73 : vector<32x256xf32>
    %75 = arith.truncf %74 : vector<32x256xf32> to vector<32x256xbf16>
    %c0_52 = arith.constant 0 : index
    %c0_53 = arith.constant 0 : index
    %76 = vector.load %arg8[%c0_52, %c0_53] : memref<64x32xbf16, #tpu.memory_space<vmem>>, vector<64x32xbf16>
    %cst_54 = arith.constant dense<0.000000e+00> : vector<64x256xf32>
    %77 = tpu.matmul %76, %75, %cst_54 {dimension_numbers = #tpu.dot_dimension_numbers<[1], [0], [0], [1], [0, 0, 1, 1], [], []>} : vector<64x32xbf16>, vector<32x256xbf16>, vector<64x256xf32> -> vector<64x256xf32>
    %c0_55 = arith.constant 0 : index
    %c0_56 = arith.constant 0 : index
    %78 = vector.load %arg9[%c0_55, %c0_56] : memref<64x1xf32, #tpu.memory_space<vmem>>, vector<64x1xf32>
    %79 = vector.broadcast %78 : vector<64x1xf32> to vector<64x256xf32>
    %80 = arith.addf %77, %79 : vector<64x256xf32>
    %cst_57 = arith.constant 0.000000e+00 : f32
    %81 = vector.broadcast %cst_57 : f32 to vector<64x256xf32>
    %82 = arith.maximumf %80, %81 : vector<64x256xf32>
    %c0_58 = arith.constant 0 : index
    %c0_59 = arith.constant 0 : index
    %83 = vector.load %arg10[%c0_58, %c0_59] : memref<64x1xf32, #tpu.memory_space<vmem>>, vector<64x1xf32>
    %84 = vector.broadcast %83 : vector<64x1xf32> to vector<64x256xf32>
    %85 = arith.mulf %82, %84 : vector<64x256xf32>
    %cst_60 = arith.constant dense<0.000000e+00> : vector<256xf32>
    %86 = vector.multi_reduction <add>, %85, %cst_60 [0] : vector<64x256xf32> to vector<256xf32>
    %87 = vector.shape_cast %86 : vector<256xf32> to vector<1x256xf32>
    %c0_61 = arith.constant 0 : index
    %c0_62 = arith.constant 0 : index
    %88 = vector.load %arg11[%c0_61, %c0_62] : memref<1x1xf32, #tpu.memory_space<vmem>>, vector<1x1xf32>
    %89 = vector.broadcast %88 : vector<1x1xf32> to vector<1x256xf32>
    %90 = arith.addf %87, %89 : vector<1x256xf32>
    %91 = arith.negf %90 : vector<1x256xf32>
    %92 = math.exp %91 : vector<1x256xf32>
    %cst_63 = arith.constant 1.000000e+00 : f32
    %93 = vector.broadcast %cst_63 : f32 to vector<1x256xf32>
    %94 = arith.addf %93, %92 : vector<1x256xf32>
    %95 = arith.divf %93, %94 : vector<1x256xf32>
    %c0_64 = arith.constant 0 : index
    %c0_65 = arith.constant 0 : index
    %96 = vector.load %arg12[%c0_64, %c0_65] : memref<1x256xf32, #tpu.memory_space<vmem>>, vector<1x256xf32>
    tpu.vector_store %arg12[%c0_64, %c0_65], %95 {strides = array<i32>} : memref<1x256xf32, #tpu.memory_space<vmem>>, vector<1x256xf32>,
    return
  }
  func.func @transform_0(%arg0: i32) -> (i32, i32) {
    %c0_i32 = arith.constant 0 : i32
    %c0_i32_0 = arith.constant 0 : i32
    return %arg0, %c0_i32 : i32, i32
  }
  func.func @transform_1(%arg0: i32) -> (i32, i32) {
    %c0_i32 = arith.constant 0 : i32
    %c0_i32_0 = arith.constant 0 : i32
    %c0_i32_1 = arith.constant 0 : i32
    return %c0_i32, %c0_i32_0 : i32, i32
  }
  func.func @transform_2(%arg0: i32) -> (i32, i32) {
    %c0_i32 = arith.constant 0 : i32
    %c0_i32_0 = arith.constant 0 : i32
    %c0_i32_1 = arith.constant 0 : i32
    return %c0_i32, %c0_i32_0 : i32, i32
  }
  func.func @transform_3(%arg0: i32) -> (i32, i32, i32) {
    %c0_i32 = arith.constant 0 : i32
    %c0_i32_0 = arith.constant 0 : i32
    %c0_i32_1 = arith.constant 0 : i32
    %c0_i32_2 = arith.constant 0 : i32
    return %c0_i32, %c0_i32_0, %c0_i32_1 : i32, i32, i32
  }
  func.func @transform_4(%arg0: i32) -> (i32, i32, i32) {
    %c0_i32 = arith.constant 0 : i32
    %c0_i32_0 = arith.constant 0 : i32
    %c0_i32_1 = arith.constant 0 : i32
    %c0_i32_2 = arith.constant 0 : i32
    return %c0_i32, %c0_i32_0, %c0_i32_1 : i32, i32, i32
  }
  func.func @transform_5(%arg0: i32) -> (i32, i32, i32) {
    %c0_i32 = arith.constant 0 : i32
    %c0_i32_0 = arith.constant 0 : i32
    %c0_i32_1 = arith.constant 0 : i32
    %c0_i32_2 = arith.constant 0 : i32
    return %c0_i32, %c0_i32_0, %c0_i32_1 : i32, i32, i32
  }
  func.func @transform_6(%arg0: i32) -> (i32, i32, i32) {
    %c0_i32 = arith.constant 0 : i32
    %c0_i32_0 = arith.constant 0 : i32
    %c0_i32_1 = arith.constant 0 : i32
    %c0_i32_2 = arith.constant 0 : i32
    return %c0_i32, %c0_i32_0, %c0_i32_1 : i32, i32, i32
  }
  func.func @transform_7(%arg0: i32) -> (i32, i32) {
    %c0_i32 = arith.constant 0 : i32
    %c0_i32_0 = arith.constant 0 : i32
    %c0_i32_1 = arith.constant 0 : i32
    return %c0_i32, %c0_i32_0 : i32, i32
  }
  func.func @transform_8(%arg0: i32) -> (i32, i32) {
    %c0_i32 = arith.constant 0 : i32
    %c0_i32_0 = arith.constant 0 : i32
    %c0_i32_1 = arith.constant 0 : i32
    return %c0_i32, %c0_i32_0 : i32, i32
  }
  func.func @transform_9(%arg0: i32) -> (i32, i32) {
    %c0_i32 = arith.constant 0 : i32
    %c0_i32_0 = arith.constant 0 : i32
    %c0_i32_1 = arith.constant 0 : i32
    return %c0_i32, %c0_i32_0 : i32, i32
  }
  func.func @transform_10(%arg0: i32) -> (i32, i32) {
    %c0_i32 = arith.constant 0 : i32
    %c0_i32_0 = arith.constant 0 : i32
    %c0_i32_1 = arith.constant 0 : i32
    return %c0_i32, %c0_i32_0 : i32, i32
  }
  func.func @transform_11(%arg0: i32) -> (i32, i32) {
    %c0_i32 = arith.constant 0 : i32
    %c0_i32_0 = arith.constant 0 : i32
    return %c0_i32, %arg0 : i32, i32
  }
}

</mosaic_0001>

<llo_original>
// kernel: tpu_custom_call.1
$region0: #{tpu_custom_call.1}
  #allocation0 [shape = 'u32[]', space=smem, size = 0x4, offset = 0x4, fixed_abs, tag = 'smem constant byte address 0x4 - core index']
  #allocation1 [shape = 'u32[72,128]{1,0:T(1,128)}', space=vmem, size = 0x9000, scoped, tag = 'internal scratch']
  #allocation2 [shape = 'f32[1,1]{1,0:T(1,128)S(1)}', space=vmem, size = 0x200, scoped, tag = 'scoped memory for tpu_custom_call.1']
  %s0 = inlined_call_operand.vmem [shape: f32[300,16], index: 0, kind: input, shape index: {}]
  %s1 = inlined_call_operand.vmem [shape: bf16[32,16], index: 1, kind: input, shape index: {}]
  %s2 = inlined_call_operand.vmem [shape: f32[32,1], index: 2, kind: input, shape index: {}]
  %s3 = inlined_call_operand.vmem [shape: bf16[3,32,32], index: 3, kind: input, shape index: {}]
  %s4 = inlined_call_operand.vmem [shape: f32[3,32,1], index: 4, kind: input, shape index: {}]
  %s5 = inlined_call_operand.vmem [shape: bf16[3,32,32], index: 5, kind: input, shape index: {}]
  %s6 = inlined_call_operand.vmem [shape: f32[3,32,1], index: 6, kind: input, shape index: {}]
  %s7 = inlined_call_operand.vmem [shape: bf16[64,32], index: 7, kind: input, shape index: {}]
  %s8 = inlined_call_operand.vmem [shape: f32[64,1], index: 8, kind: input, shape index: {}]
  %s9 = inlined_call_operand.vmem [shape: f32[64,1], index: 9, kind: input, shape index: {}]
  %s10 = inlined_call_operand.<no memory space> [shape: f32[1,1], index: 10, kind: input, shape index: {}]
  %s11 = inlined_call_operand.hbm [shape: f32[1,512], index: 11, kind: output, shape index: {}]
  %s12 = sld [smem:[#allocation0]]
  $region77: #{tpu_custom_call.1} parent=0
    _
  %s14 = ssub.s32 1, %s12
  %s15 = scalar_select 0, %s14, %s12
  %v16 = vstv %s10
  %17 = vst [vmem:[#allocation2] sm:$0x1] %v16
  $region1: #{tpu_custom_call.1} parent=0
    #allocation3 [shape = 'u8[2048]{0}', space=vmem, size = 0x800, scoped, tag = 'output window, operand 0']
    #allocation4 [shape = 's32[2]{0}', space=sflag, size = 0x8, scoped, tag = 'scoped memory for tpu_custom_call.1']
    %18 = vsyncpa [#allocation4], 0
    %s19 = scalar_lea.sflag [#allocation4], 1
    %20 = vsyncpa %s19, 0
    loop: start=0, step=1, limit=4
    $region2: #{tpu_custom_call.1} parent=1 // loop_pre_header
      _
    $region3: #{tpu_custom_call.1} parent=1 // loop_header
      %s22 = sphi 0, %s26
      %p23 = scmp.ge.s32.totalorder %s22, 4
      %s32 = sphi 0, %s34
      %s35 = sphi 0, %s32
      %s36 = sphi 0, %s35
      %s52 = sphi 0, %s36
      %s56 = sphi 0, %s56
      %s58 = sphi 0, %s56
      %s59 = sphi 0, %s58
      %s73 = sphi 0, %s59
      %s77 = sphi 0, %s77
      %s79 = sphi 0, %s77
      %s80 = sphi 0, %s79
      %s94 = sphi 0, %s80
      %s98 = sphi 0, %s98
      %s100 = sphi 0, %s98
      %s101 = sphi 0, %s100
      %s115 = sphi 0, %s101
      %s119 = sphi 0, %s119
      %s121 = sphi 0, %s119
      %s122 = sphi 0, %s121
      %s136 = sphi 0, %s122
      %s140 = sphi 0, %s140
      %s142 = sphi 0, %s140
      %s143 = sphi 0, %s142
      %s157 = sphi 0, %s143
      %s161 = sphi 0, %s161
      %s163 = sphi 0, %s161
      %s164 = sphi 0, %s163
      %s178 = sphi 0, %s164
      %s182 = sphi 0, %s182
      %s184 = sphi 0, %s182
      %s185 = sphi 0, %s184
      %s199 = sphi 0, %s185
      %s203 = sphi 0, %s203
      %s205 = sphi 0, %s203
      %s206 = sphi 0, %s205
      %s220 = sphi 0, %s206
      %s224 = sphi 0, %s224
      %s226 = sphi 0, %s224
      %s227 = sphi 0, %s226
      %s241 = sphi 0, %s227
      %s245 = sphi 0, %s245
      %s247 = sphi 0, %s245
      %s248 = sphi 0, %s247
      %s262 = sphi 0, %s248
      %s268 = sphi 0, %s270
      %s271 = sphi 0, %s268
      %s272 = sphi 0, %s271
      %s288 = sphi 0, %s272
    $region4: #{tpu_custom_call.1} parent=1 // loop_header_branch
      %25 = sbr.rel (%p23) target = $region8
    $region5: #{tpu_custom_call.1} parent=1 // loop_body
      %s27 = ssub.s32 %s22, 1
      %s28 = ssub.s32 %s22, 2
      %s29 = sadd.s32 %s22, 1
      %s30 = ssub.s32 %s22, %s29
      %p31 = scmp.eq.s32.totalorder %s30, 0
      %s33 = sadd.s32 %s32, 1
      %s34 = scalar_select %p31, %s32, %s33
      %p37 = pneg %p31
      %p38 = scmp.eq.s32.totalorder %s22, 1
      %p39 = por %p37, %p38
      %p40 = scmp.ne.s32.totalorder %s32, %s35
      %p41 = scmp.eq.s32.totalorder %s22, 0
      %p42 = por %p40, %p41
      %p43 = scmp.ne.s32.totalorder %s32, %s35
      %p44 = scmp.eq.s32.totalorder %s27, 1
      %p45 = por %p43, %p44
      %p46 = scmp.ne.s32.totalorder %s35, %s36
      %p47 = scmp.eq.s32.totalorder %s27, 0
      %p48 = por %p46, %p47
      %p49 = scmp.ne.s32.totalorder %s35, %s36
      %p50 = scmp.eq.s32.totalorder %s28, 1
      %p51 = por %p49, %p50
      %p53 = scmp.ne.s32.totalorder %s36, %s52
      %p54 = scmp.eq.s32.totalorder %s28, 0
      %p55 = por %p53, %p54
      %s57 = sadd.s32 %s56, 1
      %p60 = scmp.eq.s32.totalorder %s22, 1
      %p61 = scmp.ne.s32.totalorder %s56, %s58
      %p62 = scmp.eq.s32.totalorder %s22, 0
      %p63 = por %p61, %p62
      %p64 = scmp.ne.s32.totalorder %s56, %s58
      %p65 = scmp.eq.s32.totalorder %s27, 1
      %p66 = por %p64, %p65
      %p67 = scmp.ne.s32.totalorder %s58, %s59
      %p68 = scmp.eq.s32.totalorder %s27, 0
      %p69 = por %p67, %p68
      %p70 = scmp.ne.s32.totalorder %s58, %s59
      %p71 = scmp.eq.s32.totalorder %s28, 1
      %p72 = por %p70, %p71
      %p74 = scmp.ne.s32.totalorder %s59, %s73
      %p75 = scmp.eq.s32.totalorder %s28, 0
      %p76 = por %p74, %p75
      %s78 = sadd.s32 %s77, 1
      %p81 = scmp.eq.s32.totalorder %s22, 1
      %p82 = scmp.ne.s32.totalorder %s77, %s79
      %p83 = scmp.eq.s32.totalorder %s22, 0
      %p84 = por %p82, %p83
      %p85 = scmp.ne.s32.totalorder %s77, %s79
      %p86 = scmp.eq.s32.totalorder %s27, 1
      %p87 = por %p85, %p86
      %p88 = scmp.ne.s32.totalorder %s79, %s80
      %p89 = scmp.eq.s32.totalorder %s27, 0
      %p90 = por %p88, %p89
      %p91 = scmp.ne.s32.totalorder %s79, %s80
      %p92 = scmp.eq.s32.totalorder %s28, 1
      %p93 = por %p91, %p92
      %p95 = scmp.ne.s32.totalorder %s80, %s94
      %p96 = scmp.eq.s32.totalorder %s28, 0
      %p97 = por %p95, %p96
      %s99 = sadd.s32 %s98, 1
      %p102 = scmp.eq.s32.totalorder %s22, 1
      %p103 = scmp.ne.s32.totalorder %s98, %s100
      %p104 = scmp.eq.s32.totalorder %s22, 0
      %p105 = por %p103, %p104
      %p106 = scmp.ne.s32.totalorder %s98, %s100
      %p107 = scmp.eq.s32.totalorder %s27, 1
      %p108 = por %p106, %p107
      %p109 = scmp.ne.s32.totalorder %s100, %s101
      %p110 = scmp.eq.s32.totalorder %s27, 0
      %p111 = por %p109, %p110
      %p112 = scmp.ne.s32.totalorder %s100, %s101
      %p113 = scmp.eq.s32.totalorder %s28, 1
      %p114 = por %p112, %p113
      %p116 = scmp.ne.s32.totalorder %s101, %s115
      %p117 = scmp.eq.s32.totalorder %s28, 0
      %p118 = por %p116, %p117
      %s120 = sadd.s32 %s119, 1
      %p123 = scmp.eq.s32.totalorder %s22, 1
      %p124 = scmp.ne.s32.totalorder %s119, %s121
      %p125 = scmp.eq.s32.totalorder %s22, 0
      %p126 = por %p124, %p125
      %p127 = scmp.ne.s32.totalorder %s119, %s121
      %p128 = scmp.eq.s32.totalorder %s27, 1
      %p129 = por %p127, %p128
      %p130 = scmp.ne.s32.totalorder %s121, %s122
      %p131 = scmp.eq.s32.totalorder %s27, 0
      %p132 = por %p130, %p131
      %p133 = scmp.ne.s32.totalorder %s121, %s122
      %p134 = scmp.eq.s32.totalorder %s28, 1
      %p135 = por %p133, %p134
      %p137 = scmp.ne.s32.totalorder %s122, %s136
      %p138 = scmp.eq.s32.totalorder %s28, 0
      %p139 = por %p137, %p138
      %s141 = sadd.s32 %s140, 1
      %p144 = scmp.eq.s32.totalorder %s22, 1
      %p145 = scmp.ne.s32.totalorder %s140, %s142
      %p146 = scmp.eq.s32.totalorder %s22, 0
      %p147 = por %p145, %p146
      %p148 = scmp.ne.s32.totalorder %s140, %s142
      %p149 = scmp.eq.s32.totalorder %s27, 1
      %p150 = por %p148, %p149
      %p151 = scmp.ne.s32.totalorder %s142, %s143
      %p152 = scmp.eq.s32.totalorder %s27, 0
      %p153 = por %p151, %p152
      %p154 = scmp.ne.s32.totalorder %s142, %s143
      %p155 = scmp.eq.s32.totalorder %s28, 1
      %p156 = por %p154, %p155
      %p158 = scmp.ne.s32.totalorder %s143, %s157
      %p159 = scmp.eq.s32.totalorder %s28, 0
      %p160 = por %p158, %p159
      %s162 = sadd.s32 %s161, 1
      %p165 = scmp.eq.s32.totalorder %s22, 1
      %p166 = scmp.ne.s32.totalorder %s161, %s163
      %p167 = scmp.eq.s32.totalorder %s22, 0
      %p168 = por %p166, %p167
      %p169 = scmp.ne.s32.totalorder %s161, %s163
      %p170 = scmp.eq.s32.totalorder %s27, 1
      %p171 = por %p169, %p170
      %p172 = scmp.ne.s32.totalorder %s163, %s164
      %p173 = scmp.eq.s32.totalorder %s27, 0
      %p174 = por %p172, %p173
      %p175 = scmp.ne.s32.totalorder %s163, %s164
      %p176 = scmp.eq.s32.totalorder %s28, 1
      %p177 = por %p175, %p176
      %p179 = scmp.ne.s32.totalorder %s164, %s178
      %p180 = scmp.eq.s32.totalorder %s28, 0
      %p181 = por %p179, %p180
      %s183 = sadd.s32 %s182, 1
      %p186 = scmp.eq.s32.totalorder %s22, 1
      %p187 = scmp.ne.s32.totalorder %s182, %s184
      %p188 = scmp.eq.s32.totalorder %s22, 0
      %p189 = por %p187, %p188
      %p190 = scmp.ne.s32.totalorder %s182, %s184
      %p191 = scmp.eq.s32.totalorder %s27, 1
      %p192 = por %p190, %p191
      %p193 = scmp.ne.s32.totalorder %s184, %s185
      %p194 = scmp.eq.s32.totalorder %s27, 0
      %p195 = por %p193, %p194
      %p196 = scmp.ne.s32.totalorder %s184, %s185
      %p197 = scmp.eq.s32.totalorder %s28, 1
      %p198 = por %p196, %p197
      %p200 = scmp.ne.s32.totalorder %s185, %s199
      %p201 = scmp.eq.s32.totalorder %s28, 0
      %p202 = por %p200, %p201
      %s204 = sadd.s32 %s203, 1
      %p207 = scmp.eq.s32.totalorder %s22, 1
      %p208 = scmp.ne.s32.totalorder %s203, %s205
      %p209 = scmp.eq.s32.totalorder %s22, 0
      %p210 = por %p208, %p209
      %p211 = scmp.ne.s32.totalorder %s203, %s205
      %p212 = scmp.eq.s32.totalorder %s27, 1
      %p213 = por %p211, %p212
      %p214 = scmp.ne.s32.totalorder %s205, %s206
      %p215 = scmp.eq.s32.totalorder %s27, 0
      %p216 = por %p214, %p215
      %p217 = scmp.ne.s32.totalorder %s205, %s206
      %p218 = scmp.eq.s32.totalorder %s28, 1
      %p219 = por %p217, %p218
      %p221 = scmp.ne.s32.totalorder %s206, %s220
      %p222 = scmp.eq.s32.totalorder %s28, 0
      %p223 = por %p221, %p222
      %s225 = sadd.s32 %s224, 1
      %p228 = scmp.eq.s32.totalorder %s22, 1
      %p229 = scmp.ne.s32.totalorder %s224, %s226
      %p230 = scmp.eq.s32.totalorder %s22, 0
      %p231 = por %p229, %p230
      %p232 = scmp.ne.s32.totalorder %s224, %s226
      %p233 = scmp.eq.s32.totalorder %s27, 1
      %p234 = por %p232, %p233
      %p235 = scmp.ne.s32.totalorder %s226, %s227
      %p236 = scmp.eq.s32.totalorder %s27, 0
      %p237 = por %p235, %p236
      %p238 = scmp.ne.s32.totalorder %s226, %s227
      %p239 = scmp.eq.s32.totalorder %s28, 1
      %p240 = por %p238, %p239
      %p242 = scmp.ne.s32.totalorder %s227, %s241
      %p243 = scmp.eq.s32.totalorder %s28, 0
      %p244 = por %p242, %p243
      %s246 = sadd.s32 %s245, 1
      %p249 = scmp.eq.s32.totalorder %s22, 1
      %p250 = scmp.ne.s32.totalorder %s245, %s247
      %p251 = scmp.eq.s32.totalorder %s22, 0
      %p252 = por %p250, %p251
      %p253 = scmp.ne.s32.totalorder %s245, %s247
      %p254 = scmp.eq.s32.totalorder %s27, 1
      %p255 = por %p253, %p254
      %p256 = scmp.ne.s32.totalorder %s247, %s248
      %p257 = scmp.eq.s32.totalorder %s27, 0
      %p258 = por %p256, %p257
      %p259 = scmp.ne.s32.totalorder %s247, %s248
      %p260 = scmp.eq.s32.totalorder %s28, 1
      %p261 = por %p259, %p260
      %p263 = scmp.ne.s32.totalorder %s248, %s262
      %p264 = scmp.eq.s32.totalorder %s28, 0
      %p265 = por %p263, %p264
      %s266 = ssub.s32 %s22, %s29
      %p267 = scmp.eq.s32.totalorder %s266, 0
      %s269 = sadd.s32 %s268, 1
      %s270 = scalar_select %p267, %s268, %s269
      %p273 = pneg %p267
      %p274 = scmp.eq.s32.totalorder %s22, 1
      %p275 = por %p273, %p274
      %p276 = scmp.ne.s32.totalorder %s268, %s271
      %p277 = scmp.eq.s32.totalorder %s22, 0
      %p278 = por %p276, %p277
      %p279 = scmp.ne.s32.totalorder %s268, %s271
      %p280 = scmp.eq.s32.totalorder %s27, 1
      %p281 = por %p279, %p280
      %p282 = scmp.ne.s32.totalorder %s271, %s272
      %p283 = scmp.eq.s32.totalorder %s27, 0
      %p284 = por %p282, %p283
      %p285 = scmp.ne.s32.totalorder %s271, %s272
      %p286 = scmp.eq.s32.totalorder %s28, 1
      %p287 = por %p285, %p286
      %p289 = scmp.ne.s32.totalorder %s272, %s288
      %p290 = scmp.eq.s32.totalorder %s28, 0
      %p291 = por %p289, %p290
      %p292 = scmp.le.s32.totalorder 1, %s22
      %p293 = scmp.lt.s32.totalorder %s22, 3
      %p294 = pnand %p292, %p293
      %p295 = pneg %p294
      // Predicated region
      $region9: #{tpu_custom_call.1} parent=5 // pred_check
        _
      $region10: #{tpu_custom_call.1} parent=5 // pred_check_branch
        %297 = sbr.rel (%p294) target = $region12
      $region11: #{tpu_custom_call.1} parent=5 // pred_region
        %s298 = ssub.s32 %s22, 1
        // Predicated region
        $region13: #{tpu_custom_call.1} parent=11 // pred_check
          %p299 = pneg %p69
        $region14: #{tpu_custom_call.1} parent=11 // pred_check_branch
          %301 = sbr.rel (%p299) target = $region16
        $region15: #{tpu_custom_call.1} parent=11 // pred_region
          _
        $region16: #{tpu_custom_call.1} parent=11 // pred_fallthru
          _
        // Predicated region
        $region17: #{tpu_custom_call.1} parent=11 // pred_check
          %p302 = pneg %p90
        $region18: #{tpu_custom_call.1} parent=11 // pred_check_branch
          %304 = sbr.rel (%p302) target = $region20
        $region19: #{tpu_custom_call.1} parent=11 // pred_region
          _
        $region20: #{tpu_custom_call.1} parent=11 // pred_fallthru
          _
        // Predicated region
        $region21: #{tpu_custom_call.1} parent=11 // pred_check
          %p305 = pneg %p111
        $region22: #{tpu_custom_call.1} parent=11 // pred_check_branch
          %307 = sbr.rel (%p305) target = $region24
        $region23: #{tpu_custom_call.1} parent=11 // pred_region
          _
        $region24: #{tpu_custom_call.1} parent=11 // pred_fallthru
          _
        // Predicated region
        $region25: #{tpu_custom_call.1} parent=11 // pred_check
          %p308 = pneg %p132
        $region26: #{tpu_custom_call.1} parent=11 // pred_check_branch
          %310 = sbr.rel (%p308) target = $region28
        $region27: #{tpu_custom_call.1} parent=11 // pred_region
          _
        $region28: #{tpu_custom_call.1} parent=11 // pred_fallthru
          _
        // Predicated region
        $region29: #{tpu_custom_call.1} parent=11 // pred_check
          %p311 = pneg %p153
        $region30: #{tpu_custom_call.1} parent=11 // pred_check_branch
          %313 = sbr.rel (%p311) target = $region32
        $region31: #{tpu_custom_call.1} parent=11 // pred_region
          _
        $region32: #{tpu_custom_call.1} parent=11 // pred_fallthru
          _
        // Predicated region
        $region33: #{tpu_custom_call.1} parent=11 // pred_check
          %p314 = pneg %p174
        $region34: #{tpu_custom_call.1} parent=11 // pred_check_branch
          %316 = sbr.rel (%p314) target = $region36
        $region35: #{tpu_custom_call.1} parent=11 // pred_region
          _
        $region36: #{tpu_custom_call.1} parent=11 // pred_fallthru
          _
        // Predicated region
        $region37: #{tpu_custom_call.1} parent=11 // pred_check
          %p317 = pneg %p195
        $region38: #{tpu_custom_call.1} parent=11 // pred_check_branch
          %319 = sbr.rel (%p317) target = $region40
        $region39: #{tpu_custom_call.1} parent=11 // pred_region
          _
        $region40: #{tpu_custom_call.1} parent=11 // pred_fallthru
          _
        // Predicated region
        $region41: #{tpu_custom_call.1} parent=11 // pred_check
          %p320 = pneg %p216
        $region42: #{tpu_custom_call.1} parent=11 // pred_check_branch
          %322 = sbr.rel (%p320) target = $region44
        $region43: #{tpu_custom_call.1} parent=11 // pred_region
          _
        $region44: #{tpu_custom_call.1} parent=11 // pred_fallthru
          _
        // Predicated region
        $region45: #{tpu_custom_call.1} parent=11 // pred_check
          %p323 = pneg %p237
        $region46: #{tpu_custom_call.1} parent=11 // pred_check_branch
          %325 = sbr.rel (%p323) target = $region48
        $region47: #{tpu_custom_call.1} parent=11 // pred_region
          _
        $region48: #{tpu_custom_call.1} parent=11 // pred_fallthru
          _
        // Predicated region
        $region49: #{tpu_custom_call.1} parent=11 // pred_check
          %p326 = pneg %p258
        $region50: #{tpu_custom_call.1} parent=11 // pred_check_branch
          %328 = sbr.rel (%p326) target = $region52
        $region51: #{tpu_custom_call.1} parent=11 // pred_region
          _
        $region52: #{tpu_custom_call.1} parent=11 // pred_fallthru
          _
      $region12: #{tpu_custom_call.1} parent=5 // pred_fallthru
        _
      %p329 = scmp.lt.s32.totalorder %s22, 2
      // Predicated region
      $region53: #{tpu_custom_call.1} parent=5 // pred_check
        %p330 = pneg %p329
      $region54: #{tpu_custom_call.1} parent=5 // pred_check_branch
        %332 = sbr.rel (%p330) target = $region56
      $region55: #{tpu_custom_call.1} parent=5 // pred_region
        // Predicated region
        $region57: #{tpu_custom_call.1} parent=55 // pred_check
          %p333 = pneg %p42
        $region58: #{tpu_custom_call.1} parent=55 // pred_check_branch
          %335 = sbr.rel (%p333) target = $region60
        $region59: #{tpu_custom_call.1} parent=55 // pred_region
          %s336 = smul.u32 32, %s22
          %s337 = ssub.s32 38, %s336
          %p338 = scmp.lt.s32.totalorder %s337, 32
          %s339 = scalar_select %p338, %s337, 32
          %s340 = smul.u32 8, %s339
          %p341 = scmp.lt.s32.totalorder %s336, 37
          %s342 = scalar_select %p341, %s336, 37
          %s343 = smul.addr %s342, 8
          %s344 = scalar_lea.vmem %s0, %s343
          %s345 = smul.u32 32, %s22
          %s346 = ssub.s32 38, %s345
          %p347 = scmp.lt.s32.totalorder %s346, 32
          %s348 = scalar_select %p347, %s346, 32
          %s349 = smul.u32 8, %s348
        $region60: #{tpu_custom_call.1} parent=55 // pred_fallthru
          _
      $region56: #{tpu_custom_call.1} parent=5 // pred_fallthru
        _
      %p350 = scmp.le.s32.totalorder 1, %s22
      %p351 = scmp.lt.s32.totalorder %s22, 3
      %p352 = pnand %p350, %p351
      %p353 = pneg %p352
      // Predicated region
      $region61: #{tpu_custom_call.1} parent=5 // pred_check
        _
      $region62: #{tpu_custom_call.1} parent=5 // pred_check_branch
        %355 = sbr.rel (%p352) target = $region64
      $region63: #{tpu_custom_call.1} parent=5 // pred_region
        %s356 = ssub.s32 %s22, 1
        %s357 = smul.u32 32, %s27
        %s358 = ssub.s32 38, %s357
        %p359 = scmp.lt.s32.totalorder %s358, 32
        %s360 = scalar_select %p359, %s358, 32
        %s361 = smul.u32 8, %s360
        %p362 = scmp.lt.s32.totalorder %s357, 37
        %s363 = scalar_select %p362, %s357, 37
        %s364 = smul.addr %s363, 8
        %s365 = scalar_lea.vmem %s0, %s364
        %p366 = pneg %p48
        %p367 = pneg %p45
        %p368 = pneg %p69
        %p369 = pneg %p66
        %p370 = pneg %p90
        %p371 = pneg %p87
        %p372 = pneg %p111
        %p373 = pneg %p108
        %p374 = pneg %p132
        %p375 = pneg %p129
        %p376 = pneg %p153
        %p377 = pneg %p150
        %p378 = pneg %p174
        %p379 = pneg %p171
        %p380 = pneg %p195
        %p381 = pneg %p192
        %p382 = pneg %p216
        %p383 = pneg %p213
        %p384 = pneg %p237
        %p385 = pneg %p234
        %p386 = pneg %p258
        %p387 = pneg %p255
        %p388 = pneg %p284
        %p389 = pneg %p281
        %s390 = sand.u32 %s271, 1
        %s391 = scalar_lea.sflag [#allocation4], %s390
        %s392 = sand.u32 %s271, 1
        %s393 = smul.addr %s392, 2
        %s394 = scalar_lea.vmem [#allocation3], %s393
        %s395 = smul.u32 32, %s27
        %s396 = ssub.s32 38, %s395
        %p397 = scmp.lt.s32.totalorder %s396, 32
        %s398 = scalar_select %p397, %s396, 32
        %s399 = smul.u32 8, %s398
        %p400 = scmp.lt.s32.totalorder %s395, 37
        %s401 = scalar_select %p400, %s395, 37
        %s402 = smul.addr %s401, 8
        %s403 = scalar_lea.vmem %s0, %s402
        %s404 = smul.u32 32, %s27
        %s405 = ssub.s32 38, %s404
        %p406 = scmp.lt.s32.totalorder %s405, 32
        %s407 = scalar_select %p406, %s405, 32
        %s408 = smul.u32 8, %s407
        %s409 = smul.u32 2, %s27
        %v411 = vld [vmem:[%s403] sm:$0xff]
        %v412 = vld [vmem:[%s403 + $0x8] sm:$0xff]
        %v413 = vld [vmem:[%s403 + $0x10] sm:$0xff]
        %v414 = vld [vmem:[%s403 + $0x18] sm:$0xff]
        %v415 = vld [vmem:[%s403 + $0x20] sm:$0xff]
        %v416 = vld [vmem:[%s403 + $0x28] sm:$0xff]
        %v417 = vld [vmem:[%s403 + $0x30] sm:$0xff]
        %v418 = vld [vmem:[%s403 + $0x38] sm:$0xff]
        %v419 = vld [vmem:[%s403 + $0x40] sm:$0xff]
        %v420 = vld [vmem:[%s403 + $0x48] sm:$0xff]
        %v421 = vld [vmem:[%s403 + $0x50] sm:$0xff]
        %v422 = vld [vmem:[%s403 + $0x58] sm:$0xff]
        %v423 = vld [vmem:[%s403 + $0x60] sm:$0xff]
        %v424 = vld [vmem:[%s403 + $0x68] sm:$0xff]
        %v425 = vld [vmem:[%s403 + $0x70] sm:$0xff]
        %v426 = vld [vmem:[%s403 + $0x78] sm:$0xff]
        %v427 = vld [vmem:[%s403 + $0x80] sm:$0xff]
        %v428 = vld [vmem:[%s403 + $0x88] sm:$0xff]
        %v429 = vld [vmem:[%s403 + $0x90] sm:$0xff]
        %v430 = vld [vmem:[%s403 + $0x98] sm:$0xff]
        %v431 = vld [vmem:[%s403 + $0xa0] sm:$0xff]
        %v432 = vld [vmem:[%s403 + $0xa8] sm:$0xff]
        %v433 = vld [vmem:[%s403 + $0xb0] sm:$0xff]
        %v434 = vld [vmem:[%s403 + $0xb8] sm:$0xff]
        %v435 = vld [vmem:[%s403 + $0xc0] sm:$0xff]
        %v436 = vld [vmem:[%s403 + $0xc8] sm:$0xff]
        %v437 = vld [vmem:[%s403 + $0xd0] sm:$0xff]
        %v438 = vld [vmem:[%s403 + $0xd8] sm:$0xff]
        %v439 = vld [vmem:[%s403 + $0xe0] sm:$0xff]
        %v440 = vld [vmem:[%s403 + $0xe8] sm:$0xff]
        %v441 = vld [vmem:[%s403 + $0xf0] sm:$0xff]
        %v442 = vld [vmem:[%s403 + $0xf8] sm:$0xff]
        %v443 = vpack.c.bf16 %v412, %v411
        %v444 = vpack.c.bf16 %v414, %v413
        %v445 = vpack.c.bf16 %v416, %v415
        %v446 = vpack.c.bf16 %v418, %v417
        %v447 = vpack.c.bf16 %v420, %v419
        %v448 = vpack.c.bf16 %v422, %v421
        %v449 = vpack.c.bf16 %v424, %v423
        %v450 = vpack.c.bf16 %v426, %v425
        %v451 = vpack.c.bf16 %v428, %v427
        %v452 = vpack.c.bf16 %v430, %v429
        %v453 = vpack.c.bf16 %v432, %v431
        %v454 = vpack.c.bf16 %v434, %v433
        %v455 = vpack.c.bf16 %v436, %v435
        %v456 = vpack.c.bf16 %v438, %v437
        %v457 = vpack.c.bf16 %v440, %v439
        %v458 = vpack.c.bf16 %v442, %v441
        %v459 = vld [vmem:[%s1] sm:$0xf]
        %v460 = vld [vmem:[%s1 + $0x4] sm:$0xf]
        %v461 = vld [vmem:[%s1 + $0x8] sm:$0xf]
        %v462 = vld [vmem:[%s1 + $0xc] sm:$0xf]
        %v463 = vld [vmem:[%s2] sm:$0xff]
        %v464 = vld [vmem:[%s2 + $0x8] sm:$0xff]
        %v465 = vld [vmem:[%s2 + $0x10] sm:$0xff]
        %v466 = vld [vmem:[%s2 + $0x18] sm:$0xff]
        %468 = vset.pattern.permute.xlu0 0
        %469 = vperm.xlu0 %468, %v463
        %v470 = vpop.permute.xlu0 %469
        %473 = vset.pattern.permute.xlu0 0
        %474 = vperm.xlu0 %473, %v464
        %v475 = vpop.permute.xlu0 %474
        %478 = vset.pattern.permute.xlu0 0
        %479 = vperm.xlu0 %478, %v465
        %v480 = vpop.permute.xlu0 %479
        %483 = vset.pattern.permute.xlu0 0
        %484 = vperm.xlu0 %483, %v466
        %v485 = vpop.permute.xlu0 %484
        %v491 = vunpack.c.l.b16 %v459
        %v492 = vunpack.c.l.b16 %v460
        %v493 = vunpack.c.l.b16 %v461
        %v494 = vunpack.c.l.b16 %v462
        %v495 = vpack.c.b16 %v492, %v491
        %v496 = vpack.c.b16 %v494, %v493
        %vm497 = vcmask 130048
        %v499 = vsel %vm497, %v495, 0
        %v502 = vsel %vm497, %v496, 0
        %v505 = vsel %vm497, %v443, 0
        %v508 = vsel %vm497, %v444, 0
        %v511 = vsel %vm497, %v445, 0
        %v514 = vsel %vm497, %v446, 0
        %v517 = vsel %vm497, %v447, 0
        %v520 = vsel %vm497, %v448, 0
        %v523 = vsel %vm497, %v449, 0
        %v526 = vsel %vm497, %v450, 0
        %v529 = vsel %vm497, %v451, 0
        %v532 = vsel %vm497, %v452, 0
        %v535 = vsel %vm497, %v453, 0
        %v538 = vsel %vm497, %v454, 0
        %v541 = vsel %vm497, %v455, 0
        %v544 = vsel %vm497, %v456, 0
        %v547 = vsel %vm497, %v457, 0
        %v550 = vsel %vm497, %v458, 0
        %552 = vmatpush.bf16.xpose.msra.mxu0 %v526
        %553 = vmatpush.bf16.xpose.msra.mxu0 %v523
        %554 = vmatpush.bf16.xpose.msra.mxu0 %v520
        %555 = vmatpush.bf16.xpose.msra.mxu0 %v517
        %556 = vmatpush.bf16.xpose.msra.mxu0 %v514
        %557 = vmatpush.bf16.xpose.msra.mxu0 %v511
        %558 = vmatpush.bf16.xpose.msra.mxu0 %v508
        %559 = vmatpush.bf16.xpose.msra.mxu0 %v505
        %560 = vmatmul.bf16.gmra.mxu0 %v499
        %v561 = vpop.f32.mrf.mxu0
        %v562 = vadd.f32 %v470, %v561
        %v563 = vpop.f32.mrf.mxu0
        %v564 = vadd.f32 %v475, %v563
        %565 = vmatmul.bf16.gmra.mxu0 %v502
        %v566 = vpop.f32.mrf.mxu0
        %v567 = vadd.f32 %v480, %v566
        %v568 = vpop.f32.mrf.mxu0
        %v569 = vadd.f32 %v485, %v568
        %570 = vdwg.mxu0
        %571 = vmatpush.bf16.xpose.msra.mxu0 %v550
        %572 = vmatpush.bf16.xpose.msra.mxu0 %v547
        %573 = vmatpush.bf16.xpose.msra.mxu0 %v544
        %574 = vmatpush.bf16.xpose.msra.mxu0 %v541
        %575 = vmatpush.bf16.xpose.msra.mxu0 %v538
        %576 = vmatpush.bf16.xpose.msra.mxu0 %v535
        %577 = vmatpush.bf16.xpose.msra.mxu0 %v532
        %578 = vmatpush.bf16.xpose.msra.mxu0 %v529
        %579 = vmatmul.bf16.gmra.mxu0 %v499
        %v580 = vpop.f32.mrf.mxu0
        %v581 = vadd.f32 %v470, %v580
        %v582 = vpop.f32.mrf.mxu0
        %v583 = vadd.f32 %v475, %v582
        %584 = vmatmul.bf16.gmra.mxu0 %v502
        %v585 = vpop.f32.mrf.mxu0
        %v586 = vadd.f32 %v480, %v585
        %v587 = vpop.f32.mrf.mxu0
        %v588 = vadd.f32 %v485, %v587
        %589 = vdwg.mxu0
        %v590 = vmax.f32 %v562, 0.0
        %v591 = vmax.f32 %v581, 0.0
        %v592 = vmax.f32 %v564, 0.0
        %v593 = vmax.f32 %v583, 0.0
        %v594 = vmax.f32 %v567, 0.0
        %v595 = vmax.f32 %v586, 0.0
        %v596 = vmax.f32 %v569, 0.0
        %v597 = vmax.f32 %v588, 0.0
        %v598 = vpack.c.bf16 %v591, %v590
        %v599 = vpack.c.bf16 %v593, %v592
        %v600 = vpack.c.bf16 %v595, %v594
        %v601 = vpack.c.bf16 %v597, %v596
        %v602 = vld [vmem:[%s3] sm:$0xf]
        %v603 = vld [vmem:[%s3 + $0x4] sm:$0xf]
        %v604 = vld [vmem:[%s3 + $0x8] sm:$0xf]
        %v605 = vld [vmem:[%s3 + $0xc] sm:$0xf]
        %v606 = vld [vmem:[%s4] sm:$0xff]
        %v607 = vld [vmem:[%s4 + $0x8] sm:$0xff]
        %v608 = vld [vmem:[%s4 + $0x10] sm:$0xff]
        %v609 = vld [vmem:[%s4 + $0x18] sm:$0xff]
        %611 = vset.pattern.permute.xlu0 0
        %612 = vperm.xlu0 %611, %v606
        %v613 = vpop.permute.xlu0 %612
        %616 = vset.pattern.permute.xlu0 0
        %617 = vperm.xlu0 %616, %v607
        %v618 = vpop.permute.xlu0 %617
        %621 = vset.pattern.permute.xlu0 0
        %622 = vperm.xlu0 %621, %v608
        %v623 = vpop.permute.xlu0 %622
        %626 = vset.pattern.permute.xlu0 0
        %627 = vperm.xlu0 %626, %v609
        %v628 = vpop.permute.xlu0 %627
        %v634 = vunpack.c.l.b16 %v602
        %v635 = vunpack.c.l.b16 %v603
        %v636 = vunpack.c.l.b16 %v604
        %v637 = vunpack.c.l.b16 %v605
        %v638 = vpack.c.b16 %v635, %v634
        %v639 = vpack.c.b16 %v637, %v636
        %v644 = vunpack.c.l.b16 %v598
        %v645 = vunpack.c.h.b16 %v598
        %v646 = vunpack.c.l.b16 %v599
        %v647 = vunpack.c.h.b16 %v599
        %v648 = vunpack.c.l.b16 %v600
        %v649 = vunpack.c.h.b16 %v600
        %v650 = vunpack.c.l.b16 %v601
        %v651 = vunpack.c.h.b16 %v601
        %v652 = vpack.c.b16 %v646, %v644
        %v653 = vpack.c.b16 %v647, %v645
        %v654 = vpack.c.b16 %v650, %v648
        %v655 = vpack.c.b16 %v651, %v649
        %vm660 = vcmask 261120
        %v662 = vsel %vm660, %v638, 0
        %v665 = vsel %vm660, %v639, 0
        %667 = vmatpush.bf16.msra.mxu0 0
        %668 = vmatpush.bf16.msra.mxu0 0
        %669 = vmatpush.bf16.msra.mxu0 0
        %670 = vmatpush.bf16.msra.mxu0 0
        %671 = vmatpush.bf16.msra.mxu0 0
        %672 = vmatpush.bf16.msra.mxu0 0
        %673 = vmatpush.bf16.msra.mxu0 %v654
        %674 = vmatpush.bf16.msra.mxu0 %v652
        %675 = vmatmul.bf16.gmra.mxu0 %v662
        %v676 = vpop.f32.mrf.mxu0
        %v677 = vadd.f32 %v613, %v676
        %v678 = vpop.f32.mrf.mxu0
        %v679 = vadd.f32 %v618, %v678
        %680 = vmatmul.bf16.gmra.mxu0 %v665
        %v681 = vpop.f32.mrf.mxu0
        %v682 = vadd.f32 %v623, %v681
        %v683 = vpop.f32.mrf.mxu0
        %v684 = vadd.f32 %v628, %v683
        %685 = vdwg.mxu0
        %686 = vmatpush.bf16.msra.mxu0 0
        %687 = vmatpush.bf16.msra.mxu0 0
        %688 = vmatpush.bf16.msra.mxu0 0
        %689 = vmatpush.bf16.msra.mxu0 0
        %690 = vmatpush.bf16.msra.mxu0 0
        %691 = vmatpush.bf16.msra.mxu0 0
        %692 = vmatpush.bf16.msra.mxu0 %v655
        %693 = vmatpush.bf16.msra.mxu0 %v653
        %694 = vmatmul.bf16.gmra.mxu0 %v662
        %v695 = vpop.f32.mrf.mxu0
        %v696 = vadd.f32 %v613, %v695
        %v697 = vpop.f32.mrf.mxu0
        %v698 = vadd.f32 %v618, %v697
        %699 = vmatmul.bf16.gmra.mxu0 %v665
        %v700 = vpop.f32.mrf.mxu0
        %v701 = vadd.f32 %v623, %v700
        %v702 = vpop.f32.mrf.mxu0
        %v703 = vadd.f32 %v628, %v702
        %704 = vdwg.mxu0
        %v705 = vmax.f32 %v677, 0.0
        %v706 = vmax.f32 %v696, 0.0
        %v707 = vmax.f32 %v679, 0.0
        %v708 = vmax.f32 %v698, 0.0
        %v709 = vmax.f32 %v682, 0.0
        %v710 = vmax.f32 %v701, 0.0
        %v711 = vmax.f32 %v684, 0.0
        %v712 = vmax.f32 %v703, 0.0
        %v713 = vpack.c.bf16 %v707, %v705
        %v714 = vpack.c.bf16 %v708, %v706
        %v715 = vpack.c.bf16 %v711, %v709
        %v716 = vpack.c.bf16 %v712, %v710
        %v717 = vld [vmem:[%s5] sm:$0xf]
        %v718 = vld [vmem:[%s5 + $0x4] sm:$0xf]
        %v719 = vld [vmem:[%s5 + $0x8] sm:$0xf]
        %v720 = vld [vmem:[%s5 + $0xc] sm:$0xf]
        %v721 = vld [vmem:[%s6] sm:$0xff]
        %v722 = vld [vmem:[%s6 + $0x8] sm:$0xff]
        %v723 = vld [vmem:[%s6 + $0x10] sm:$0xff]
        %v724 = vld [vmem:[%s6 + $0x18] sm:$0xff]
        %726 = vset.pattern.permute.xlu0 0
        %727 = vperm.xlu0 %726, %v721
        %v728 = vpop.permute.xlu0 %727
        %731 = vset.pattern.permute.xlu0 0
        %732 = vperm.xlu0 %731, %v722
        %v733 = vpop.permute.xlu0 %732
        %736 = vset.pattern.permute.xlu0 0
        %737 = vperm.xlu0 %736, %v723
        %v738 = vpop.permute.xlu0 %737
        %741 = vset.pattern.permute.xlu0 0
        %742 = vperm.xlu0 %741, %v724
        %v743 = vpop.permute.xlu0 %742
        %v749 = vunpack.c.l.b16 %v717
        %v750 = vunpack.c.l.b16 %v718
        %v751 = vunpack.c.l.b16 %v719
        %v752 = vunpack.c.l.b16 %v720
        %v753 = vpack.c.b16 %v750, %v749
        %v754 = vpack.c.b16 %v752, %v751
        %v756 = vsel %vm660, %v753, 0
        %v759 = vsel %vm660, %v754, 0
        %761 = vmatpush.bf16.msra.mxu0 0
        %762 = vmatpush.bf16.msra.mxu0 0
        %763 = vmatpush.bf16.msra.mxu0 0
        %764 = vmatpush.bf16.msra.mxu0 0
        %765 = vmatpush.bf16.msra.mxu0 0
        %766 = vmatpush.bf16.msra.mxu0 0
        %767 = vmatpush.bf16.msra.mxu0 %v715
        %768 = vmatpush.bf16.msra.mxu0 %v713
        %769 = vmatmul.bf16.gmra.mxu0 %v756
        %v770 = vpop.f32.mrf.mxu0
        %v771 = vadd.f32 %v728, %v770
        %v772 = vpop.f32.mrf.mxu0
        %v773 = vadd.f32 %v733, %v772
        %774 = vmatmul.bf16.gmra.mxu0 %v759
        %v775 = vpop.f32.mrf.mxu0
        %v776 = vadd.f32 %v738, %v775
        %v777 = vpop.f32.mrf.mxu0
        %v778 = vadd.f32 %v743, %v777
        %779 = vdwg.mxu0
        %780 = vmatpush.bf16.msra.mxu0 0
        %781 = vmatpush.bf16.msra.mxu0 0
        %782 = vmatpush.bf16.msra.mxu0 0
        %783 = vmatpush.bf16.msra.mxu0 0
        %784 = vmatpush.bf16.msra.mxu0 0
        %785 = vmatpush.bf16.msra.mxu0 0
        %786 = vmatpush.bf16.msra.mxu0 %v716
        %787 = vmatpush.bf16.msra.mxu0 %v714
        %788 = vmatmul.bf16.gmra.mxu0 %v756
        %v789 = vpop.f32.mrf.mxu0
        %v790 = vadd.f32 %v728, %v789
        %v791 = vpop.f32.mrf.mxu0
        %v792 = vadd.f32 %v733, %v791
        %793 = vmatmul.bf16.gmra.mxu0 %v759
        %v794 = vpop.f32.mrf.mxu0
        %v795 = vadd.f32 %v738, %v794
        %v796 = vpop.f32.mrf.mxu0
        %v797 = vadd.f32 %v743, %v796
        %798 = vdwg.mxu0
        %v799 = vunpack.c.l.bf16 %v598
        %v800 = vunpack.c.h.bf16 %v598
        %v801 = vunpack.c.l.bf16 %v599
        %v802 = vunpack.c.h.bf16 %v599
        %v803 = vunpack.c.l.bf16 %v600
        %v804 = vunpack.c.h.bf16 %v600
        %v805 = vunpack.c.l.bf16 %v601
        %v806 = vunpack.c.h.bf16 %v601
        %v807 = vadd.f32 %v771, %v799
        %v808 = vadd.f32 %v790, %v800
        %v809 = vadd.f32 %v773, %v801
        %v810 = vadd.f32 %v792, %v802
        %v811 = vadd.f32 %v776, %v803
        %v812 = vadd.f32 %v795, %v804
        %v813 = vadd.f32 %v778, %v805
        %v814 = vadd.f32 %v797, %v806
        %v815 = vmax.f32 %v807, 0.0
        %v816 = vmax.f32 %v808, 0.0
        %v817 = vmax.f32 %v809, 0.0
        %v818 = vmax.f32 %v810, 0.0
        %v819 = vmax.f32 %v811, 0.0
        %v820 = vmax.f32 %v812, 0.0
        %v821 = vmax.f32 %v813, 0.0
        %v822 = vmax.f32 %v814, 0.0
        %v823 = vpack.c.bf16 %v816, %v815
        %v824 = vpack.c.bf16 %v818, %v817
        %v825 = vpack.c.bf16 %v820, %v819
        %v826 = vpack.c.bf16 %v822, %v821
        %s827 = scalar_lea.vmem %s3, 16
        %v828 = vld [vmem:[%s827] sm:$0xf]
        %v829 = vld [vmem:[%s827 + $0x4] sm:$0xf]
        %v830 = vld [vmem:[%s827 + $0x8] sm:$0xf]
        %v831 = vld [vmem:[%s827 + $0xc] sm:$0xf]
        %s832 = scalar_lea.vmem %s4, 32
        %v833 = vld [vmem:[%s832] sm:$0xff]
        %v834 = vld [vmem:[%s832 + $0x8] sm:$0xff]
        %v835 = vld [vmem:[%s832 + $0x10] sm:$0xff]
        %v836 = vld [vmem:[%s832 + $0x18] sm:$0xff]
        %838 = vset.pattern.permute.xlu0 0
        %839 = vperm.xlu0 %838, %v833
        %v840 = vpop.permute.xlu0 %839
        %843 = vset.pattern.permute.xlu0 0
        %844 = vperm.xlu0 %843, %v834
        %v845 = vpop.permute.xlu0 %844
        %848 = vset.pattern.permute.xlu0 0
        %849 = vperm.xlu0 %848, %v835
        %v850 = vpop.permute.xlu0 %849
        %853 = vset.pattern.permute.xlu0 0
        %854 = vperm.xlu0 %853, %v836
        %v855 = vpop.permute.xlu0 %854
        %v861 = vunpack.c.l.b16 %v828
        %v862 = vunpack.c.l.b16 %v829
        %v863 = vunpack.c.l.b16 %v830
        %v864 = vunpack.c.l.b16 %v831
        %v865 = vpack.c.b16 %v862, %v861
        %v866 = vpack.c.b16 %v864, %v863
        %v871 = vunpack.c.l.b16 %v823
        %v872 = vunpack.c.h.b16 %v823
        %v873 = vunpack.c.l.b16 %v824
        %v874 = vunpack.c.h.b16 %v824
        %v875 = vunpack.c.l.b16 %v825
        %v876 = vunpack.c.h.b16 %v825
        %v877 = vunpack.c.l.b16 %v826
        %v878 = vunpack.c.h.b16 %v826
        %v879 = vpack.c.b16 %v873, %v871
        %v880 = vpack.c.b16 %v874, %v872
        %v881 = vpack.c.b16 %v877, %v875
        %v882 = vpack.c.b16 %v878, %v876
        %v888 = vsel %vm660, %v865, 0
        %v891 = vsel %vm660, %v866, 0
        %893 = vmatpush.bf16.msra.mxu0 0
        %894 = vmatpush.bf16.msra.mxu0 0
        %895 = vmatpush.bf16.msra.mxu0 0
        %896 = vmatpush.bf16.msra.mxu0 0
        %897 = vmatpush.bf16.msra.mxu0 0
        %898 = vmatpush.bf16.msra.mxu0 0
        %899 = vmatpush.bf16.msra.mxu0 %v881
        %900 = vmatpush.bf16.msra.mxu0 %v879
        %901 = vmatmul.bf16.gmra.mxu0 %v888
        %v902 = vpop.f32.mrf.mxu0
        %v903 = vadd.f32 %v840, %v902
        %v904 = vpop.f32.mrf.mxu0
        %v905 = vadd.f32 %v845, %v904
        %906 = vmatmul.bf16.gmra.mxu0 %v891
        %v907 = vpop.f32.mrf.mxu0
        %v908 = vadd.f32 %v850, %v907
        %v909 = vpop.f32.mrf.mxu0
        %v910 = vadd.f32 %v855, %v909
        %911 = vdwg.mxu0
        %912 = vmatpush.bf16.msra.mxu0 0
        %913 = vmatpush.bf16.msra.mxu0 0
        %914 = vmatpush.bf16.msra.mxu0 0
        %915 = vmatpush.bf16.msra.mxu0 0
        %916 = vmatpush.bf16.msra.mxu0 0
        %917 = vmatpush.bf16.msra.mxu0 0
        %918 = vmatpush.bf16.msra.mxu0 %v882
        %919 = vmatpush.bf16.msra.mxu0 %v880
        %920 = vmatmul.bf16.gmra.mxu0 %v888
        %v921 = vpop.f32.mrf.mxu0
        %v922 = vadd.f32 %v840, %v921
        %v923 = vpop.f32.mrf.mxu0
        %v924 = vadd.f32 %v845, %v923
        %925 = vmatmul.bf16.gmra.mxu0 %v891
        %v926 = vpop.f32.mrf.mxu0
        %v927 = vadd.f32 %v850, %v926
        %v928 = vpop.f32.mrf.mxu0
        %v929 = vadd.f32 %v855, %v928
        %930 = vdwg.mxu0
        %v931 = vmax.f32 %v903, 0.0
        %v932 = vmax.f32 %v922, 0.0
        %v933 = vmax.f32 %v905, 0.0
        %v934 = vmax.f32 %v924, 0.0
        %v935 = vmax.f32 %v908, 0.0
        %v936 = vmax.f32 %v927, 0.0
        %v937 = vmax.f32 %v910, 0.0
        %v938 = vmax.f32 %v929, 0.0
        %v939 = vpack.c.bf16 %v933, %v931
        %v940 = vpack.c.bf16 %v934, %v932
        %v941 = vpack.c.bf16 %v937, %v935
        %v942 = vpack.c.bf16 %v938, %v936
        %s943 = scalar_lea.vmem %s5, 16
        %v944 = vld [vmem:[%s943] sm:$0xf]
        %v945 = vld [vmem:[%s943 + $0x4] sm:$0xf]
        %v946 = vld [vmem:[%s943 + $0x8] sm:$0xf]
        %v947 = vld [vmem:[%s943 + $0xc] sm:$0xf]
        %s948 = scalar_lea.vmem %s6, 32
        %v949 = vld [vmem:[%s948] sm:$0xff]
        %v950 = vld [vmem:[%s948 + $0x8] sm:$0xff]
        %v951 = vld [vmem:[%s948 + $0x10] sm:$0xff]
        %v952 = vld [vmem:[%s948 + $0x18] sm:$0xff]
        %954 = vset.pattern.permute.xlu0 0
        %955 = vperm.xlu0 %954, %v949
        %v956 = vpop.permute.xlu0 %955
        %959 = vset.pattern.permute.xlu0 0
        %960 = vperm.xlu0 %959, %v950
        %v961 = vpop.permute.xlu0 %960
        %964 = vset.pattern.permute.xlu0 0
        %965 = vperm.xlu0 %964, %v951
        %v966 = vpop.permute.xlu0 %965
        %969 = vset.pattern.permute.xlu0 0
        %970 = vperm.xlu0 %969, %v952
        %v971 = vpop.permute.xlu0 %970
        %v977 = vunpack.c.l.b16 %v944
        %v978 = vunpack.c.l.b16 %v945
        %v979 = vunpack.c.l.b16 %v946
        %v980 = vunpack.c.l.b16 %v947
        %v981 = vpack.c.b16 %v978, %v977
        %v982 = vpack.c.b16 %v980, %v979
        %v984 = vsel %vm660, %v981, 0
        %v987 = vsel %vm660, %v982, 0
        %989 = vmatpush.bf16.msra.mxu0 0
        %990 = vmatpush.bf16.msra.mxu0 0
        %991 = vmatpush.bf16.msra.mxu0 0
        %992 = vmatpush.bf16.msra.mxu0 0
        %993 = vmatpush.bf16.msra.mxu0 0
        %994 = vmatpush.bf16.msra.mxu0 0
        %995 = vmatpush.bf16.msra.mxu0 %v941
        %996 = vmatpush.bf16.msra.mxu0 %v939
        %997 = vmatmul.bf16.gmra.mxu0 %v984
        %v998 = vpop.f32.mrf.mxu0
        %v999 = vadd.f32 %v956, %v998
        %v1000 = vpop.f32.mrf.mxu0
        %v1001 = vadd.f32 %v961, %v1000
        %1002 = vmatmul.bf16.gmra.mxu0 %v987
        %v1003 = vpop.f32.mrf.mxu0
        %v1004 = vadd.f32 %v966, %v1003
        %v1005 = vpop.f32.mrf.mxu0
        %v1006 = vadd.f32 %v971, %v1005
        %1007 = vdwg.mxu0
        %1008 = vmatpush.bf16.msra.mxu0 0
        %1009 = vmatpush.bf16.msra.mxu0 0
        %1010 = vmatpush.bf16.msra.mxu0 0
        %1011 = vmatpush.bf16.msra.mxu0 0
        %1012 = vmatpush.bf16.msra.mxu0 0
        %1013 = vmatpush.bf16.msra.mxu0 0
        %1014 = vmatpush.bf16.msra.mxu0 %v942
        %1015 = vmatpush.bf16.msra.mxu0 %v940
        %1016 = vmatmul.bf16.gmra.mxu0 %v984
        %v1017 = vpop.f32.mrf.mxu0
        %v1018 = vadd.f32 %v956, %v1017
        %v1019 = vpop.f32.mrf.mxu0
        %v1020 = vadd.f32 %v961, %v1019
        %1021 = vmatmul.bf16.gmra.mxu0 %v987
        %v1022 = vpop.f32.mrf.mxu0
        %v1023 = vadd.f32 %v966, %v1022
        %v1024 = vpop.f32.mrf.mxu0
        %v1025 = vadd.f32 %v971, %v1024
        %1026 = vdwg.mxu0
        %v1027 = vunpack.c.l.bf16 %v823
        %v1028 = vunpack.c.h.bf16 %v823
        %v1029 = vunpack.c.l.bf16 %v824
        %v1030 = vunpack.c.h.bf16 %v824
        %v1031 = vunpack.c.l.bf16 %v825
        %v1032 = vunpack.c.h.bf16 %v825
        %v1033 = vunpack.c.l.bf16 %v826
        %v1034 = vunpack.c.h.bf16 %v826
        %v1035 = vadd.f32 %v999, %v1027
        %v1036 = vadd.f32 %v1018, %v1028
        %v1037 = vadd.f32 %v1001, %v1029
        %v1038 = vadd.f32 %v1020, %v1030
        %v1039 = vadd.f32 %v1004, %v1031
        %v1040 = vadd.f32 %v1023, %v1032
        %v1041 = vadd.f32 %v1006, %v1033
        %v1042 = vadd.f32 %v1025, %v1034
        %v1043 = vmax.f32 %v1035, 0.0
        %v1044 = vmax.f32 %v1036, 0.0
        %v1045 = vmax.f32 %v1037, 0.0
        %v1046 = vmax.f32 %v1038, 0.0
        %v1047 = vmax.f32 %v1039, 0.0
        %v1048 = vmax.f32 %v1040, 0.0
        %v1049 = vmax.f32 %v1041, 0.0
        %v1050 = vmax.f32 %v1042, 0.0
        %v1051 = vpack.c.bf16 %v1044, %v1043
        %v1052 = vpack.c.bf16 %v1046, %v1045
        %v1053 = vpack.c.bf16 %v1048, %v1047
        %v1054 = vpack.c.bf16 %v1050, %v1049
        %s1055 = scalar_lea.vmem %s3, 32
        %v1056 = vld [vmem:[%s1055] sm:$0xf]
        %v1057 = vld [vmem:[%s1055 + $0x4] sm:$0xf]
        %v1058 = vld [vmem:[%s1055 + $0x8] sm:$0xf]
        %v1059 = vld [vmem:[%s1055 + $0xc] sm:$0xf]
        %s1060 = scalar_lea.vmem %s4, 64
        %v1061 = vld [vmem:[%s1060] sm:$0xff]
        %v1062 = vld [vmem:[%s1060 + $0x8] sm:$0xff]
        %v1063 = vld [vmem:[%s1060 + $0x10] sm:$0xff]
        %v1064 = vld [vmem:[%s1060 + $0x18] sm:$0xff]
        %1066 = vset.pattern.permute.xlu0 0
        %1067 = vperm.xlu0 %1066, %v1061
        %v1068 = vpop.permute.xlu0 %1067
        %1071 = vset.pattern.permute.xlu0 0
        %1072 = vperm.xlu0 %1071, %v1062
        %v1073 = vpop.permute.xlu0 %1072
        %1076 = vset.pattern.permute.xlu0 0
        %1077 = vperm.xlu0 %1076, %v1063
        %v1078 = vpop.permute.xlu0 %1077
        %1081 = vset.pattern.permute.xlu0 0
        %1082 = vperm.xlu0 %1081, %v1064
        %v1083 = vpop.permute.xlu0 %1082
        %v1089 = vunpack.c.l.b16 %v1056
        %v1090 = vunpack.c.l.b16 %v1057
        %v1091 = vunpack.c.l.b16 %v1058
        %v1092 = vunpack.c.l.b16 %v1059
        %v1093 = vpack.c.b16 %v1090, %v1089
        %v1094 = vpack.c.b16 %v1092, %v1091
        %v1099 = vunpack.c.l.b16 %v1051
        %v1100 = vunpack.c.h.b16 %v1051
        %v1101 = vunpack.c.l.b16 %v1052
        %v1102 = vunpack.c.h.b16 %v1052
        %v1103 = vunpack.c.l.b16 %v1053
        %v1104 = vunpack.c.h.b16 %v1053
        %v1105 = vunpack.c.l.b16 %v1054
        %v1106 = vunpack.c.h.b16 %v1054
        %v1107 = vpack.c.b16 %v1101, %v1099
        %v1108 = vpack.c.b16 %v1102, %v1100
        %v1109 = vpack.c.b16 %v1105, %v1103
        %v1110 = vpack.c.b16 %v1106, %v1104
        %v1116 = vsel %vm660, %v1093, 0
        %v1119 = vsel %vm660, %v1094, 0
        %1121 = vmatpush.bf16.msra.mxu0 0
        %1122 = vmatpush.bf16.msra.mxu0 0
        %1123 = vmatpush.bf16.msra.mxu0 0
        %1124 = vmatpush.bf16.msra.mxu0 0
        %1125 = vmatpush.bf16.msra.mxu0 0
        %1126 = vmatpush.bf16.msra.mxu0 0
        %1127 = vmatpush.bf16.msra.mxu0 %v1109
        %1128 = vmatpush.bf16.msra.mxu0 %v1107
        %1129 = vmatmul.bf16.gmra.mxu0 %v1116
        %v1130 = vpop.f32.mrf.mxu0
        %v1131 = vadd.f32 %v1068, %v1130
        %v1132 = vpop.f32.mrf.mxu0
        %v1133 = vadd.f32 %v1073, %v1132
        %1134 = vmatmul.bf16.gmra.mxu0 %v1119
        %v1135 = vpop.f32.mrf.mxu0
        %v1136 = vadd.f32 %v1078, %v1135
        %v1137 = vpop.f32.mrf.mxu0
        %v1138 = vadd.f32 %v1083, %v1137
        %1139 = vdwg.mxu0
        %1140 = vmatpush.bf16.msra.mxu0 0
        %1141 = vmatpush.bf16.msra.mxu0 0
        %1142 = vmatpush.bf16.msra.mxu0 0
        %1143 = vmatpush.bf16.msra.mxu0 0
        %1144 = vmatpush.bf16.msra.mxu0 0
        %1145 = vmatpush.bf16.msra.mxu0 0
        %1146 = vmatpush.bf16.msra.mxu0 %v1110
        %1147 = vmatpush.bf16.msra.mxu0 %v1108
        %1148 = vmatmul.bf16.gmra.mxu0 %v1116
        %v1149 = vpop.f32.mrf.mxu0
        %v1150 = vadd.f32 %v1068, %v1149
        %v1151 = vpop.f32.mrf.mxu0
        %v1152 = vadd.f32 %v1073, %v1151
        %1153 = vmatmul.bf16.gmra.mxu0 %v1119
        %v1154 = vpop.f32.mrf.mxu0
        %v1155 = vadd.f32 %v1078, %v1154
        %v1156 = vpop.f32.mrf.mxu0
        %v1157 = vadd.f32 %v1083, %v1156
        %1158 = vdwg.mxu0
        %v1159 = vmax.f32 %v1131, 0.0
        %v1160 = vmax.f32 %v1150, 0.0
        %v1161 = vmax.f32 %v1133, 0.0
        %v1162 = vmax.f32 %v1152, 0.0
        %v1163 = vmax.f32 %v1136, 0.0
        %v1164 = vmax.f32 %v1155, 0.0
        %v1165 = vmax.f32 %v1138, 0.0
        %v1166 = vmax.f32 %v1157, 0.0
        %v1167 = vpack.c.bf16 %v1161, %v1159
        %v1168 = vpack.c.bf16 %v1162, %v1160
        %v1169 = vpack.c.bf16 %v1165, %v1163
        %v1170 = vpack.c.bf16 %v1166, %v1164
        %s1171 = scalar_lea.vmem %s5, 32
        %v1172 = vld [vmem:[%s1171] sm:$0xf]
        %v1173 = vld [vmem:[%s1171 + $0x4] sm:$0xf]
        %v1174 = vld [vmem:[%s1171 + $0x8] sm:$0xf]
        %v1175 = vld [vmem:[%s1171 + $0xc] sm:$0xf]
        %s1176 = scalar_lea.vmem %s6, 64
        %v1177 = vld [vmem:[%s1176] sm:$0xff]
        %v1178 = vld [vmem:[%s1176 + $0x8] sm:$0xff]
        %v1179 = vld [vmem:[%s1176 + $0x10] sm:$0xff]
        %v1180 = vld [vmem:[%s1176 + $0x18] sm:$0xff]
        %1182 = vset.pattern.permute.xlu0 0
        %1183 = vperm.xlu0 %1182, %v1177
        %v1184 = vpop.permute.xlu0 %1183
        %1187 = vset.pattern.permute.xlu0 0
        %1188 = vperm.xlu0 %1187, %v1178
        %v1189 = vpop.permute.xlu0 %1188
        %1192 = vset.pattern.permute.xlu0 0
        %1193 = vperm.xlu0 %1192, %v1179
        %v1194 = vpop.permute.xlu0 %1193
        %1197 = vset.pattern.permute.xlu0 0
        %1198 = vperm.xlu0 %1197, %v1180
        %v1199 = vpop.permute.xlu0 %1198
        %v1205 = vunpack.c.l.b16 %v1172
        %v1206 = vunpack.c.l.b16 %v1173
        %v1207 = vunpack.c.l.b16 %v1174
        %v1208 = vunpack.c.l.b16 %v1175
        %v1209 = vpack.c.b16 %v1206, %v1205
        %v1210 = vpack.c.b16 %v1208, %v1207
        %v1212 = vsel %vm660, %v1209, 0
        %v1215 = vsel %vm660, %v1210, 0
        %1217 = vmatpush.bf16.msra.mxu0 0
        %1218 = vmatpush.bf16.msra.mxu0 0
        %1219 = vmatpush.bf16.msra.mxu0 0
        %1220 = vmatpush.bf16.msra.mxu0 0
        %1221 = vmatpush.bf16.msra.mxu0 0
        %1222 = vmatpush.bf16.msra.mxu0 0
        %1223 = vmatpush.bf16.msra.mxu0 %v1169
        %1224 = vmatpush.bf16.msra.mxu0 %v1167
        %1225 = vmatmul.bf16.gmra.mxu0 %v1212
        %v1226 = vpop.f32.mrf.mxu0
        %v1227 = vadd.f32 %v1184, %v1226
        %v1228 = vpop.f32.mrf.mxu0
        %v1229 = vadd.f32 %v1189, %v1228
        %1230 = vmatmul.bf16.gmra.mxu0 %v1215
        %v1231 = vpop.f32.mrf.mxu0
        %v1232 = vadd.f32 %v1194, %v1231
        %v1233 = vpop.f32.mrf.mxu0
        %v1234 = vadd.f32 %v1199, %v1233
        %1235 = vdwg.mxu0
        %1236 = vmatpush.bf16.msra.mxu0 0
        %1237 = vmatpush.bf16.msra.mxu0 0
        %1238 = vmatpush.bf16.msra.mxu0 0
        %1239 = vmatpush.bf16.msra.mxu0 0
        %1240 = vmatpush.bf16.msra.mxu0 0
        %1241 = vmatpush.bf16.msra.mxu0 0
        %1242 = vmatpush.bf16.msra.mxu0 %v1170
        %1243 = vmatpush.bf16.msra.mxu0 %v1168
        %1244 = vmatmul.bf16.gmra.mxu0 %v1212
        %v1245 = vpop.f32.mrf.mxu0
        %v1246 = vadd.f32 %v1184, %v1245
        %v1247 = vpop.f32.mrf.mxu0
        %v1248 = vadd.f32 %v1189, %v1247
        %1249 = vmatmul.bf16.gmra.mxu0 %v1215
        %v1250 = vpop.f32.mrf.mxu0
        %v1251 = vadd.f32 %v1194, %v1250
        %v1252 = vpop.f32.mrf.mxu0
        %v1253 = vadd.f32 %v1199, %v1252
        %1254 = vdwg.mxu0
        %v1255 = vunpack.c.l.bf16 %v1051
        %v1256 = vunpack.c.h.bf16 %v1051
        %v1257 = vunpack.c.l.bf16 %v1052
        %v1258 = vunpack.c.h.bf16 %v1052
        %v1259 = vunpack.c.l.bf16 %v1053
        %v1260 = vunpack.c.h.bf16 %v1053
        %v1261 = vunpack.c.l.bf16 %v1054
        %v1262 = vunpack.c.h.bf16 %v1054
        %v1263 = vadd.f32 %v1227, %v1255
        %v1264 = vadd.f32 %v1246, %v1256
        %v1265 = vadd.f32 %v1229, %v1257
        %v1266 = vadd.f32 %v1248, %v1258
        %v1267 = vadd.f32 %v1232, %v1259
        %v1268 = vadd.f32 %v1251, %v1260
        %v1269 = vadd.f32 %v1234, %v1261
        %v1270 = vadd.f32 %v1253, %v1262
        %v1271 = vmax.f32 %v1263, 0.0
        %v1272 = vmax.f32 %v1264, 0.0
        %v1273 = vmax.f32 %v1265, 0.0
        %v1274 = vmax.f32 %v1266, 0.0
        %v1275 = vmax.f32 %v1267, 0.0
        %v1276 = vmax.f32 %v1268, 0.0
        %v1277 = vmax.f32 %v1269, 0.0
        %v1278 = vmax.f32 %v1270, 0.0
        %v1279 = vpack.c.bf16 %v1273, %v1271
        %v1280 = vpack.c.bf16 %v1274, %v1272
        %v1281 = vpack.c.bf16 %v1277, %v1275
        %v1282 = vpack.c.bf16 %v1278, %v1276
        %v1283 = vld [vmem:[%s7] sm:$0xf]
        %v1284 = vld [vmem:[%s7 + $0x4] sm:$0xf]
        %v1285 = vld [vmem:[%s7 + $0x8] sm:$0xf]
        %v1286 = vld [vmem:[%s7 + $0xc] sm:$0xf]
        %v1287 = vld [vmem:[%s7 + $0x10] sm:$0xf]
        %v1288 = vld [vmem:[%s7 + $0x14] sm:$0xf]
        %v1289 = vld [vmem:[%s7 + $0x18] sm:$0xf]
        %v1290 = vld [vmem:[%s7 + $0x1c] sm:$0xf]
        %v1291 = vld [vmem:[%s8] sm:$0xff]
        %v1292 = vld [vmem:[%s8 + $0x8] sm:$0xff]
        %v1293 = vld [vmem:[%s8 + $0x10] sm:$0xff]
        %v1294 = vld [vmem:[%s8 + $0x18] sm:$0xff]
        %v1295 = vld [vmem:[%s8 + $0x20] sm:$0xff]
        %v1296 = vld [vmem:[%s8 + $0x28] sm:$0xff]
        %v1297 = vld [vmem:[%s8 + $0x30] sm:$0xff]
        %v1298 = vld [vmem:[%s8 + $0x38] sm:$0xff]
        %1300 = vset.pattern.permute.xlu0 0
        %1301 = vperm.xlu0 %1300, %v1291
        %v1302 = vpop.permute.xlu0 %1301
        %1305 = vset.pattern.permute.xlu0 0
        %1306 = vperm.xlu0 %1305, %v1292
        %v1307 = vpop.permute.xlu0 %1306
        %1310 = vset.pattern.permute.xlu0 0
        %1311 = vperm.xlu0 %1310, %v1293
        %v1312 = vpop.permute.xlu0 %1311
        %1315 = vset.pattern.permute.xlu0 0
        %1316 = vperm.xlu0 %1315, %v1294
        %v1317 = vpop.permute.xlu0 %1316
        %1320 = vset.pattern.permute.xlu0 0
        %1321 = vperm.xlu0 %1320, %v1295
        %v1322 = vpop.permute.xlu0 %1321
        %1325 = vset.pattern.permute.xlu0 0
        %1326 = vperm.xlu0 %1325, %v1296
        %v1327 = vpop.permute.xlu0 %1326
        %1330 = vset.pattern.permute.xlu0 0
        %1331 = vperm.xlu0 %1330, %v1297
        %v1332 = vpop.permute.xlu0 %1331
        %1335 = vset.pattern.permute.xlu0 0
        %1336 = vperm.xlu0 %1335, %v1298
        %v1337 = vpop.permute.xlu0 %1336
        %v1347 = vunpack.c.l.b16 %v1283
        %v1348 = vunpack.c.l.b16 %v1284
        %v1349 = vunpack.c.l.b16 %v1285
        %v1350 = vunpack.c.l.b16 %v1286
        %v1351 = vunpack.c.l.b16 %v1287
        %v1352 = vunpack.c.l.b16 %v1288
        %v1353 = vunpack.c.l.b16 %v1289
        %v1354 = vunpack.c.l.b16 %v1290
        %v1355 = vpack.c.b16 %v1348, %v1347
        %v1356 = vpack.c.b16 %v1350, %v1349
        %v1357 = vpack.c.b16 %v1352, %v1351
        %v1358 = vpack.c.b16 %v1354, %v1353
        %v1360 = vsel %vm660, %v1355, 0
        %v1363 = vsel %vm660, %v1356, 0
        %v1366 = vsel %vm660, %v1357, 0
        %v1369 = vsel %vm660, %v1358, 0
        %1371 = vmatpush.bf16.msra.mxu0 0
        %1372 = vmatpush.bf16.msra.mxu0 0
        %1373 = vmatpush.bf16.msra.mxu0 0
        %1374 = vmatpush.bf16.msra.mxu0 0
        %1375 = vmatpush.bf16.msra.mxu0 0
        %1376 = vmatpush.bf16.msra.mxu0 0
        %1377 = vmatpush.bf16.msra.mxu0 %v1281
        %1378 = vmatpush.bf16.msra.mxu0 %v1279
        %1379 = vmatmul.bf16.gmra.mxu0 %v1360
        %v1380 = vpop.f32.mrf.mxu0
        %v1381 = vadd.f32 %v1302, %v1380
        %v1382 = vpop.f32.mrf.mxu0
        %v1383 = vadd.f32 %v1307, %v1382
        %1384 = vmatmul.bf16.gmra.mxu0 %v1363
        %v1385 = vpop.f32.mrf.mxu0
        %v1386 = vadd.f32 %v1312, %v1385
        %v1387 = vpop.f32.mrf.mxu0
        %v1388 = vadd.f32 %v1317, %v1387
        %1389 = vmatmul.bf16.gmra.mxu0 %v1366
        %v1390 = vpop.f32.mrf.mxu0
        %v1391 = vadd.f32 %v1322, %v1390
        %v1392 = vpop.f32.mrf.mxu0
        %v1393 = vadd.f32 %v1327, %v1392
        %1394 = vmatmul.bf16.gmra.mxu0 %v1369
        %v1395 = vpop.f32.mrf.mxu0
        %v1396 = vadd.f32 %v1332, %v1395
        %v1397 = vpop.f32.mrf.mxu0
        %v1398 = vadd.f32 %v1337, %v1397
        %1399 = vdwg.mxu0
        %1400 = vmatpush.bf16.msra.mxu0 0
        %1401 = vmatpush.bf16.msra.mxu0 0
        %1402 = vmatpush.bf16.msra.mxu0 0
        %1403 = vmatpush.bf16.msra.mxu0 0
        %1404 = vmatpush.bf16.msra.mxu0 0
        %1405 = vmatpush.bf16.msra.mxu0 0
        %1406 = vmatpush.bf16.msra.mxu0 %v1282
        %1407 = vmatpush.bf16.msra.mxu0 %v1280
        %1408 = vmatmul.bf16.gmra.mxu0 %v1360
        %v1409 = vpop.f32.mrf.mxu0
        %v1410 = vadd.f32 %v1302, %v1409
        %v1411 = vpop.f32.mrf.mxu0
        %v1412 = vadd.f32 %v1307, %v1411
        %1413 = vmatmul.bf16.gmra.mxu0 %v1363
        %v1414 = vpop.f32.mrf.mxu0
        %v1415 = vadd.f32 %v1312, %v1414
        %v1416 = vpop.f32.mrf.mxu0
        %v1417 = vadd.f32 %v1317, %v1416
        %1418 = vmatmul.bf16.gmra.mxu0 %v1366
        %v1419 = vpop.f32.mrf.mxu0
        %v1420 = vadd.f32 %v1322, %v1419
        %v1421 = vpop.f32.mrf.mxu0
        %v1422 = vadd.f32 %v1327, %v1421
        %1423 = vmatmul.bf16.gmra.mxu0 %v1369
        %v1424 = vpop.f32.mrf.mxu0
        %v1425 = vadd.f32 %v1332, %v1424
        %v1426 = vpop.f32.mrf.mxu0
        %v1427 = vadd.f32 %v1337, %v1426
        %1428 = vdwg.mxu0
        %v1429 = vmax.f32 %v1381, 0.0
        %v1430 = vmax.f32 %v1410, 0.0
        %v1431 = vmax.f32 %v1383, 0.0
        %v1432 = vmax.f32 %v1412, 0.0
        %v1433 = vmax.f32 %v1386, 0.0
        %v1434 = vmax.f32 %v1415, 0.0
        %v1435 = vmax.f32 %v1388, 0.0
        %v1436 = vmax.f32 %v1417, 0.0
        %v1437 = vmax.f32 %v1391, 0.0
        %v1438 = vmax.f32 %v1420, 0.0
        %v1439 = vmax.f32 %v1393, 0.0
        %v1440 = vmax.f32 %v1422, 0.0
        %v1441 = vmax.f32 %v1396, 0.0
        %v1442 = vmax.f32 %v1425, 0.0
        %v1443 = vmax.f32 %v1398, 0.0
        %v1444 = vmax.f32 %v1427, 0.0
        %v1445 = vld [vmem:[%s9] sm:$0xff]
        %v1446 = vld [vmem:[%s9 + $0x8] sm:$0xff]
        %v1447 = vld [vmem:[%s9 + $0x10] sm:$0xff]
        %v1448 = vld [vmem:[%s9 + $0x18] sm:$0xff]
        %v1449 = vld [vmem:[%s9 + $0x20] sm:$0xff]
        %v1450 = vld [vmem:[%s9 + $0x28] sm:$0xff]
        %v1451 = vld [vmem:[%s9 + $0x30] sm:$0xff]
        %v1452 = vld [vmem:[%s9 + $0x38] sm:$0xff]
        %1454 = vset.pattern.permute.xlu0 0
        %1455 = vperm.xlu0 %1454, %v1445
        %v1456 = vpop.permute.xlu0 %1455
        %1459 = vset.pattern.permute.xlu0 0
        %1460 = vperm.xlu0 %1459, %v1446
        %v1461 = vpop.permute.xlu0 %1460
        %1464 = vset.pattern.permute.xlu0 0
        %1465 = vperm.xlu0 %1464, %v1447
        %v1466 = vpop.permute.xlu0 %1465
        %1469 = vset.pattern.permute.xlu0 0
        %1470 = vperm.xlu0 %1469, %v1448
        %v1471 = vpop.permute.xlu0 %1470
        %1474 = vset.pattern.permute.xlu0 0
        %1475 = vperm.xlu0 %1474, %v1449
        %v1476 = vpop.permute.xlu0 %1475
        %1479 = vset.pattern.permute.xlu0 0
        %1480 = vperm.xlu0 %1479, %v1450
        %v1481 = vpop.permute.xlu0 %1480
        %1484 = vset.pattern.permute.xlu0 0
        %1485 = vperm.xlu0 %1484, %v1451
        %v1486 = vpop.permute.xlu0 %1485
        %1489 = vset.pattern.permute.xlu0 0
        %1490 = vperm.xlu0 %1489, %v1452
        %v1491 = vpop.permute.xlu0 %1490
        %v1493 = vmul.f32 %v1429, %v1456
        %v1494 = vmul.f32 %v1430, %v1456
        %v1495 = vmul.f32 %v1431, %v1461
        %v1496 = vmul.f32 %v1432, %v1461
        %v1497 = vmul.f32 %v1433, %v1466
        %v1498 = vmul.f32 %v1434, %v1466
        %v1499 = vmul.f32 %v1435, %v1471
        %v1500 = vmul.f32 %v1436, %v1471
        %v1501 = vmul.f32 %v1437, %v1476
        %v1502 = vmul.f32 %v1438, %v1476
        %v1503 = vmul.f32 %v1439, %v1481
        %v1504 = vmul.f32 %v1440, %v1481
        %v1505 = vmul.f32 %v1441, %v1486
        %v1506 = vmul.f32 %v1442, %v1486
        %v1507 = vmul.f32 %v1443, %v1491
        %v1508 = vmul.f32 %v1444, %v1491
        %v1509 = vadd.f32 %v1493, %v1495
        %v1510 = vadd.f32 %v1509, %v1497
        %v1511 = vadd.f32 %v1510, %v1499
        %v1512 = vadd.f32 %v1511, %v1501
        %v1513 = vadd.f32 %v1512, %v1503
        %v1514 = vadd.f32 %v1513, %v1505
        %v1515 = vadd.f32 %v1514, %v1507
        %v1516 = vrot.slane %v1515, 4
        %v1517 = vadd.f32 %v1515, %v1516
        %v1518 = vrot.slane %v1517, 2
        %v1519 = vadd.f32 %v1517, %v1518
        %v1520 = vrot.slane %v1519, 1
        %v1521 = vadd.f32 %v1519, %v1520
        %v1522 = vadd.f32 %v1494, %v1496
        %v1523 = vadd.f32 %v1522, %v1498
        %v1524 = vadd.f32 %v1523, %v1500
        %v1525 = vadd.f32 %v1524, %v1502
        %v1526 = vadd.f32 %v1525, %v1504
        %v1527 = vadd.f32 %v1526, %v1506
        %v1528 = vadd.f32 %v1527, %v1508
        %v1529 = vrot.slane %v1528, 4
        %v1530 = vadd.f32 %v1528, %v1529
        %v1531 = vrot.slane %v1530, 2
        %v1532 = vadd.f32 %v1530, %v1531
        %v1533 = vrot.slane %v1532, 1
        %v1534 = vadd.f32 %v1532, %v1533
        %v1535 = vld [vmem:[#allocation2] sm:$0x1]
        %1537 = vset.pattern.permute.xlu0 0
        %1538 = vperm.xlu0 %1537, %v1535
        %v1539 = vpop.permute.xlu0 %1538
        %v1541 = vperm.slane %v1539, 0
        %v1542 = vadd.f32 %v1521, %v1541
        %v1543 = vadd.f32 %v1534, %v1541
        %v1544 = vxor.u32 %v1542, 2147483648
        %v1545 = vxor.u32 %v1543, 2147483648
        %v1546 = vmul.f32 %v1544, 1.442695
        %v1547 = vpow.pop %v1546
        %v1548 = vmul.f32 %v1545, 1.442695
        %v1549 = vpow.pop %v1548
        %v1550 = vadd.f32 %v1547, 1.0
        %v1551 = vadd.f32 %v1549, 1.0
        %v1552 = vrcp.pop %v1550
        %v1553 = vmul.f32 %v1550, %v1552
        %v1554 = vsub.f32 1.0, %v1553
        %v1555 = vmul.f32 %v1552, %v1554
        %v1556 = vadd.f32 %v1552, %v1555
        %vm1557 = vweird.f32 %v1550
        %vm1558 = vweird.f32 %v1552
        %vm1559 = vmor %vm1557, %vm1558
        %v1560 = vsel %vm1559, %v1552, %v1556
        %v1561 = vand.u32 2147483647, %v1550
        %vm1562 = vcmp.eq.f32.partialorder %v1561, 8.507059e+37
        %v1563 = vand.u32 %v1550, 2147483648
        %v1564 = vor.u32 1.1754944e-38, %v1563
        %v1565 = vsel %vm1562, %v1564, %v1560
        %v1566 = vmul.f32 1.0, %v1565
        %v1567 = vrcp.pop %v1551
        %v1568 = vmul.f32 %v1551, %v1567
        %v1569 = vsub.f32 1.0, %v1568
        %v1570 = vmul.f32 %v1567, %v1569
        %v1571 = vadd.f32 %v1567, %v1570
        %vm1572 = vweird.f32 %v1551
        %vm1573 = vweird.f32 %v1567
        %vm1574 = vmor %vm1572, %vm1573
        %v1575 = vsel %vm1574, %v1567, %v1571
        %v1576 = vand.u32 2147483647, %v1551
        %vm1577 = vcmp.eq.f32.partialorder %v1576, 8.507059e+37
        %v1578 = vand.u32 %v1551, 2147483648
        %v1579 = vor.u32 1.1754944e-38, %v1578
        %v1580 = vsel %vm1577, %v1579, %v1575
        %v1581 = vmul.f32 1.0, %v1580
        %v1584 = vrot.slane %v1581, 7
        %vm1585 = vcmask 1040384
        %v1586 = vsel %vm1585, %v1566, %v1584
        %v1588 = vlaneseq
        %vm1589 = vcmp.ge.s32.totalorder %v1588, 0
        %vm1590 = vcmp.lt.s32.totalorder %v1588, 256
        %vm1591 = vmand %vm1589, %vm1590
        %1592 = vst.msk [vmem:[%s394] sm:$0x3] %vm1591, %v1586
        %s1593 = sand.u32 %s271, 1
        %s1594 = scalar_lea.sflag [#allocation4], %s1593
        %s1595 = sand.u32 %s271, 1
        %s1596 = smul.addr %s1595, 2
        %s1597 = scalar_lea.vmem [#allocation3], %s1596
        // Predicated region
        $region65: #{tpu_custom_call.1} parent=63 // pred_check
          %p1598 = pneg %p281
        $region66: #{tpu_custom_call.1} parent=63 // pred_check_branch
          %1600 = sbr.rel (%p1598) target = $region68
        $region67: #{tpu_custom_call.1} parent=63 // pred_region
          %s1601 = smul.u32 2, %s27
          %1603 = vsyncadd %s1594, 0
          %s1604 = scalar_lea.hbm %s11, %s1601
          %s1606 = sshll.u32 %s1597, 4
          %s1607 = int_to_ptr.vmem [resolvable:$true] %s1606
          %s1608 = sshll.u32 %s1604, 4
          %s1609 = int_to_ptr.hbm [resolvable:$true] %s1608
          %1611 = dma.vmem_to_hbm [thread:$0]  %s1607, 32, %s1609, %s1594
        $region68: #{tpu_custom_call.1} parent=63 // pred_fallthru
          _
      $region64: #{tpu_custom_call.1} parent=5 // pred_fallthru
        _
      %p1612 = scmp.le.s32.totalorder 2, %s22
      // Predicated region
      $region69: #{tpu_custom_call.1} parent=5 // pred_check
        %p1613 = pneg %p1612
      $region70: #{tpu_custom_call.1} parent=5 // pred_check_branch
        %1615 = sbr.rel (%p1613) target = $region72
      $region71: #{tpu_custom_call.1} parent=5 // pred_region
        %s1616 = ssub.s32 %s22, 2
        // Predicated region
        $region73: #{tpu_custom_call.1} parent=71 // pred_check
          %p1617 = pneg %p287
        $region74: #{tpu_custom_call.1} parent=71 // pred_check_branch
          %1619 = sbr.rel (%p1617) target = $region76
        $region75: #{tpu_custom_call.1} parent=71 // pred_region
          %s1620 = sand.u32 %s272, 1
          %s1621 = scalar_lea.sflag [#allocation4], %s1620
          %s1622 = sand.u32 %s272, 1
          %s1623 = smul.addr %s1622, 2
          %s1624 = scalar_lea.vmem [#allocation3], %s1623
          %1626 = dma.done %s1621, 32
        $region76: #{tpu_custom_call.1} parent=71 // pred_fallthru
          _
      $region72: #{tpu_custom_call.1} parent=5 // pred_fallthru
        _
    $region6: #{tpu_custom_call.1} parent=1 // loop_footer
      %s26 = sadd.s32 1, %s22
    $region7: #{tpu_custom_call.1} parent=1 // loop_footer_branch
      %21 = sbr.rel target = $region3
    $region8: #{tpu_custom_call.1} parent=1 // loop_exit
      _
    %1627 = vsyncpa [#allocation4], 1
    %s1628 = scalar_lea.sflag [#allocation4], 1
    %1629 = vsyncpa %s1628, 1

</llo_original>
